<compile_context>
chip_gen: v6e
topology: v6e:2x2x1
jax: 0.10.0
libtpu: 0.0.40
codegen_flags: <defaults>
</compile_context>

<pallas_src>
import functools
import math

import jax
import jax.numpy as jnp
from jax.experimental import pallas as pl
from jax.experimental.pallas import tpu as pltpu

_CP = 128  # lane-padded channel / feature width


# ----------------------------- Pallas kernels ------------------------------

def _conv_pool_relu_kernel(p_ref, w_ref, b_ref, o_ref, *, pp):
    """Fused conv-as-matmul + bias + 2x2 maxpool + ReLU for one batch image.

    p_ref: (4*pp, K*K*Cin)  im2col patches, rows ordered (corner dh,dw | ph,pw)
    w_ref: (K*K*Cin, 128)   packed weights (Cout padded to 128 lanes)
    b_ref: (1, 128)         padded bias
    o_ref: (pp, 128)        pooled+ReLU'd output, rows = (ph,pw), lanes = channels
    """
    z = jnp.dot(p_ref[...], w_ref[...], preferred_element_type=jnp.float32) + b_ref[...]
    # The four pooling corners are contiguous, tile-aligned (pp % 8 == 0) row blocks.
    c00 = z[0 * pp:1 * pp]
    c01 = z[1 * pp:2 * pp]
    c10 = z[2 * pp:3 * pp]
    c11 = z[3 * pp:4 * pp]
    pooled = jnp.maximum(jnp.maximum(c00, c01), jnp.maximum(c10, c11))
    o_ref[...] = jnp.maximum(pooled, 0.0)  # relu(maxpool(conv)) == maxpool then relu


def _head_kernel(x_ref, w1_ref, b1_ref, w2_ref, b2_ref, o_ref):
    """fc1 + ReLU + fc2 + log_softmax, all widths padded to 128 lanes.

    Padded fc2 bias entries are -1e30 so padded logits never contribute to the
    softmax normalization; the caller slices the first 10 columns.
    """
    h = jnp.dot(x_ref[...], w1_ref[...], preferred_element_type=jnp.float32) + b1_ref[...]
    h = jnp.maximum(h, 0.0)
    logits = jnp.dot(h, w2_ref[...], preferred_element_type=jnp.float32) + b2_ref[...]
    m = jnp.max(logits, axis=-1, keepdims=True)
    lse = jnp.log(jnp.sum(jnp.exp(logits - m), axis=-1, keepdims=True)) + m
    o_ref[...] = logits - lse


_VMEM_SPEC = pl.BlockSpec(memory_space=pltpu.MemorySpace.VMEM)


# ------------------------------ JAX wrappers --------------------------------

def _corner_pooled_patches(x, k):
    """x: (B, H, W, C) NHWC -> im2col patches grouped by pooling corner.

    Returns (patches, (PH, PW)):
      patches[(b*4 + dh*2 + dw)*PH*PW + ph*PW + pw, (kh*k + kw)*C + ci]
          = x[b, 2*ph + dh + kh, 2*pw + dw + kw, ci]
    """
    B, H, W, C = x.shape
    OH, OW = H - k + 1, W - k + 1
    PH, PW = OH // 2, OW // 2
    taps = jnp.stack(
        [x[:, i:i + OH, j:j + OW, :] for i in range(k) for j in range(k)], axis=1
    )  # (B, k*k, OH, OW, C)
    t = taps.reshape(B, k * k, PH, 2, PW, 2, C)
    t = t.transpose(0, 3, 5, 2, 4, 1, 6)          # (B, dh, dw, ph, pw, tap, ci)
    return t.reshape(B * 4 * PH * PW, k * k * C), (PH, PW)


def _fused_conv_pool_relu(patches, wmat, bias, *, batch, pp):
    """One pallas_call: conv-matmul + bias + 2x2 maxpool + ReLU, gridded over batch."""
    rows, kc = patches.shape
    assert rows == batch * 4 * pp
    cp = wmat.shape[1]
    kern = functools.partial(_conv_pool_relu_kernel, pp=pp)
    return pl.pallas_call(
        kern,
        out_shape=jax.ShapeDtypeStruct((batch * pp, cp), jnp.float32),
        grid_spec=pltpu.PrefetchScalarGridSpec(
            num_scalar_prefetch=0,
            grid=(batch,),
            in_specs=[
                pl.BlockSpec((4 * pp, kc), lambda b: (b, 0)),
                pl.BlockSpec((kc, cp), lambda b: (0, 0)),
                pl.BlockSpec((1, cp), lambda b: (0, 0)),
            ],
            out_specs=pl.BlockSpec((pp, cp), lambda b: (b, 0)),
        ),
        compiler_params=pltpu.CompilerParams(dimension_semantics=("parallel",)),
    )(patches, wmat, bias)


def _mlp_head(x, w1, b1, w2, b2):
    B = x.shape[0]
    return pl.pallas_call(
        _head_kernel,
        out_shape=jax.ShapeDtypeStruct((B, w2.shape[1]), jnp.float32),
        in_specs=[_VMEM_SPEC] * 5,
        out_specs=_VMEM_SPEC,
    )(x, w1, b1, w2, b2)


def net_forward(params, x):
    """x: (B, 1, 28, 28) float32 (NCHW, like PyTorch) -> (B, 10) log-probs."""
    B = x.shape[0]
    x = jnp.transpose(x, (0, 2, 3, 1))                                  # NHWC (B,28,28,1)

    p1, (ph1, pw1) = _corner_pooled_patches(x, 5)                       # (B*4*144, 25)
    a1 = _fused_conv_pool_relu(p1, params["c1_w"], params["c1_b"],
                               batch=B, pp=ph1 * pw1)                   # (B*144, 128)
    a1 = a1.reshape(B, ph1, pw1, _CP)[..., :10]                         # (B,12,12,10)

    # conv2_drop (Dropout2d): identity in eval mode
    p2, (ph2, pw2) = _corner_pooled_patches(a1, 5)                      # (B*4*16, 250)
    a2 = _fused_conv_pool_relu(p2, params["c2_w"], params["c2_b"],
                               batch=B, pp=ph2 * pw2)                   # (B*16, 128)
    h = a2.reshape(B, ph2, pw2, _CP)[..., :20].reshape(B, ph2 * pw2 * 20)  # (B, 320)

    # F.dropout: identity in eval mode
    logp = _mlp_head(h, params["fc1_w"], params["fc1_b"],
                     params["fc2_w"], params["fc2_b"])                  # (B, 128) padded
    return logp[:, :10]


# --------------------------- parameters & packing ----------------------------

def init_raw_params(key):
    """PyTorch-like layouts/init. NOTE: fc1 input features are in (h, w, c) order
    (channels-last flatten) instead of PyTorch's (c, h, w); with random init this is
    just a permutation and preserves the module's semantics."""
    def uniform(k, shape, fan_in):
        bound = 1.0 / math.sqrt(fan_in)
        return jax.random.uniform(k, shape, jnp.float32, -bound, bound)

    ks = jax.random.split(key, 8)
    return {
        "conv1_w": uniform(ks[0], (10, 1, 5, 5), 1 * 5 * 5),
        "conv1_b": uniform(ks[1], (10,), 1 * 5 * 5),
        "conv2_w": uniform(ks[2], (20, 10, 5, 5), 10 * 5 * 5),
        "conv2_b": uniform(ks[3], (20,), 10 * 5 * 5),
        "fc1_w": uniform(ks[4], (320, 50), 320),   # (in, out)
        "fc1_b": uniform(ks[5], (50,), 320),
        "fc2_w": uniform(ks[6], (50, 10), 50),
        "fc2_b": uniform(ks[7], (10,), 50),
    }


def pack_params(raw):
    """Pack/pad weights once (hoisted out of the forward path)."""
    def pack_conv(w, b):
        cout, cin, k, _ = w.shape
        wm = jnp.transpose(w, (2, 3, 1, 0)).reshape(k * k * cin, cout)  # rows = (kh,kw,ci)
        wm = jnp.pad(wm, ((0, 0), (0, _CP - cout)))
        bm = jnp.pad(b.reshape(1, -1), ((0, 0), (0, _CP - cout)))
        return wm, bm

    c1w, c1b = pack_conv(raw["conv1_w"], raw["conv1_b"])
    c2w, c2b = pack_conv(raw["conv2_w"], raw["conv2_b"])
    f1w = jnp.pad(raw["fc1_w"], ((0, 0), (0, _CP - 50)))
    f1b = jnp.pad(raw["fc1_b"].reshape(1, -1), ((0, 0), (0, _CP - 50)))
    f2w = jnp.pad(raw["fc2_w"], ((0, _CP - 50), (0, _CP - 10)))
    # padded logit columns get -1e30 so they never contribute to the softmax
    f2b = jnp.pad(raw["fc2_b"].reshape(1, -1), ((0, 0), (0, _CP - 10)),
                  constant_values=-1e30)
    return {"c1_w": c1w, "c1_b": c1b, "c2_w": c2w, "c2_b": c2b,
            "fc1_w": f1w, "fc1_b": f1b, "fc2_w": f2w, "fc2_b": f2b}


# ------------------------------ plain-JAX reference --------------------------

def _ref_forward(raw, x_nchw):
    x = jnp.transpose(x_nchw, (0, 2, 3, 1))

    def conv(x, w, b):
        w_hwio = jnp.transpose(w, (2, 3, 1, 0))
        y = jax.lax.conv_general_dilated(
            x, w_hwio, (1, 1), "VALID",
            dimension_numbers=("NHWC", "HWIO", "NHWC"))
        return y + b.reshape(1, 1, 1, -1)

    def pool_relu(y):
        B, H, W, C = y.shape
        y = y.reshape(B, H // 2, 2, W // 2, 2, C).max(axis=(2, 4))
        return jnp.maximum(y, 0.0)

    y = pool_relu(conv(x, raw["conv1_w"], raw["conv1_b"]))
    y = pool_relu(conv(y, raw["conv2_w"], raw["conv2_b"]))
    h = y.reshape(y.shape[0], -1)                       # (B, 320), (h,w,c) order
    h = jnp.maximum(h @ raw["fc1_w"] + raw["fc1_b"], 0.0)
    logits = h @ raw["fc2_w"] + raw["fc2_b"]
    return jax.nn.log_softmax(logits, axis=-1)


if __name__ == "__main__":
    key = jax.random.PRNGKey(0)
    pkey, xkey = jax.random.split(key)
    raw = init_raw_params(pkey)
    params = pack_params(raw)

    # MNIST-shaped input: batch=2, 1 channel, 28x28 (so the flatten is 20*4*4 = 320)
    x = jax.random.normal(xkey, (2, 1, 28, 28), jnp.float32)

    out = jax.jit(net_forward)(params, x)
    out = jax.block_until_ready(out)

    assert out.shape == (2, 10)
    # compare against an independent plain-JAX reference (lax.conv path)
    ref = _ref_forward(raw, x)
    err = float(jnp.max(jnp.abs(out - ref)))
    assert err < 5e-2, f"mismatch vs reference: {err}"
    # log_softmax rows should exponentiate-sum to 1
    assert bool(jnp.all(jnp.abs(jnp.sum(jnp.exp(out), axis=-1) - 1.0) < 1e-4))
    print("KERNEL_OK")
</pallas_src>

<mosaic_0001>
module attributes {stable_mosaic.version = 11 : i64} {
  func.func @_conv_pool_relu_kernel(%arg0: i32, %arg1: memref<576x25xf32, #tpu.memory_space<vmem>>, %arg2: memref<25x128xf32, #tpu.memory_space<vmem>>, %arg3: memref<1x128xf32, #tpu.memory_space<vmem>>, %arg4: memref<144x128xf32, #tpu.memory_space<vmem>>) attributes {dimension_semantics = [#tpu.dimension_semantics<parallel>], iteration_bounds = array<i64: 2>, scalar_prefetch = 0 : i64, scratch_operands = 0 : i64, tpu.core_type = #tpu.core_type<tc>, window_params = [{transform_indices = @transform_0, window_bounds = array<i64: 576, 25>}, {pipeline_mode = #tpu.pipeline_mode<synchronous>, transform_indices = @transform_1, window_bounds = array<i64: 25, 128>}, {pipeline_mode = #tpu.pipeline_mode<synchronous>, transform_indices = @transform_2, window_bounds = array<i64: 1, 128>}, {transform_indices = @transform_3, window_bounds = array<i64: 144, 128>}]} {
    %c0 = arith.constant 0 : index
    %c0_0 = arith.constant 0 : index
    %0 = vector.load %arg1[%c0, %c0_0] : memref<576x25xf32, #tpu.memory_space<vmem>>, vector<576x25xf32>
    %c0_1 = arith.constant 0 : index
    %c0_2 = arith.constant 0 : index
    %1 = vector.load %arg2[%c0_1, %c0_2] : memref<25x128xf32, #tpu.memory_space<vmem>>, vector<25x128xf32>
    %cst = arith.constant dense<0.000000e+00> : vector<576x128xf32>
    %2 = tpu.matmul %0, %1, %cst {dimension_numbers = #tpu.dot_dimension_numbers<[1], [0], [0], [1], [0, 0, 1, 1], [], []>} : vector<576x25xf32>, vector<25x128xf32>, vector<576x128xf32> -> vector<576x128xf32>
    %c0_3 = arith.constant 0 : index
    %c0_4 = arith.constant 0 : index
    %3 = vector.load %arg3[%c0_3, %c0_4] : memref<1x128xf32, #tpu.memory_space<vmem>>, vector<1x128xf32>
    %4 = vector.broadcast %3 : vector<1x128xf32> to vector<576x128xf32>
    %5 = arith.addf %2, %4 : vector<576x128xf32>
    %6 = vector.extract_strided_slice %5 {offsets = [0, 0], sizes = [144, 128], strides = [1, 1]} : vector<576x128xf32> to vector<144x128xf32>
    %7 = vector.extract_strided_slice %5 {offsets = [144, 0], sizes = [144, 128], strides = [1, 1]} : vector<576x128xf32> to vector<144x128xf32>
    %8 = vector.extract_strided_slice %5 {offsets = [288, 0], sizes = [144, 128], strides = [1, 1]} : vector<576x128xf32> to vector<144x128xf32>
    %9 = vector.extract_strided_slice %5 {offsets = [432, 0], sizes = [144, 128], strides = [1, 1]} : vector<576x128xf32> to vector<144x128xf32>
    %10 = arith.maximumf %6, %7 : vector<144x128xf32>
    %11 = arith.maximumf %8, %9 : vector<144x128xf32>
    %12 = arith.maximumf %10, %11 : vector<144x128xf32>
    %cst_5 = arith.constant 0.000000e+00 : f32
    %13 = vector.broadcast %cst_5 : f32 to vector<144x128xf32>
    %14 = arith.maximumf %12, %13 : vector<144x128xf32>
    %c0_6 = arith.constant 0 : index
    %c0_7 = arith.constant 0 : index
    %15 = vector.load %arg4[%c0_6, %c0_7] : memref<144x128xf32, #tpu.memory_space<vmem>>, vector<144x128xf32>
    tpu.vector_store %arg4[%c0_6, %c0_7], %14 {strides = array<i32>} : memref<144x128xf32, #tpu.memory_space<vmem>>, vector<144x128xf32>,
    return
  }
  func.func @transform_0(%arg0: i32) -> (i32, i32) {
    %c0_i32 = arith.constant 0 : i32
    %c0_i32_0 = arith.constant 0 : i32
    return %arg0, %c0_i32 : i32, i32
  }
  func.func @transform_1(%arg0: i32) -> (i32, i32) {
    %c0_i32 = arith.constant 0 : i32
    %c0_i32_0 = arith.constant 0 : i32
    %c0_i32_1 = arith.constant 0 : i32
    return %c0_i32, %c0_i32_0 : i32, i32
  }
  func.func @transform_2(%arg0: i32) -> (i32, i32) {
    %c0_i32 = arith.constant 0 : i32
    %c0_i32_0 = arith.constant 0 : i32
    %c0_i32_1 = arith.constant 0 : i32
    return %c0_i32, %c0_i32_0 : i32, i32
  }
  func.func @transform_3(%arg0: i32) -> (i32, i32) {
    %c0_i32 = arith.constant 0 : i32
    %c0_i32_0 = arith.constant 0 : i32
    return %arg0, %c0_i32 : i32, i32
  }
}

module attributes {stable_mosaic.version = 11 : i64} {
  func.func @_conv_pool_relu_kernel(%arg0: i32, %arg1: memref<64x250xf32, #tpu.memory_space<vmem>>, %arg2: memref<250x128xf32, #tpu.memory_space<vmem>>, %arg3: memref<1x128xf32, #tpu.memory_space<vmem>>, %arg4: memref<16x128xf32, #tpu.memory_space<vmem>>) attributes {dimension_semantics = [#tpu.dimension_semantics<parallel>], iteration_bounds = array<i64: 2>, scalar_prefetch = 0 : i64, scratch_operands = 0 : i64, tpu.core_type = #tpu.core_type<tc>, window_params = [{transform_indices = @transform_0, window_bounds = array<i64: 64, 250>}, {pipeline_mode = #tpu.pipeline_mode<synchronous>, transform_indices = @transform_1, window_bounds = array<i64: 250, 128>}, {pipeline_mode = #tpu.pipeline_mode<synchronous>, transform_indices = @transform_2, window_bounds = array<i64: 1, 128>}, {transform_indices = @transform_3, window_bounds = array<i64: 16, 128>}]} {
    %c0 = arith.constant 0 : index
    %c0_0 = arith.constant 0 : index
    %0 = vector.load %arg1[%c0, %c0_0] : memref<64x250xf32, #tpu.memory_space<vmem>>, vector<64x250xf32>
    %c0_1 = arith.constant 0 : index
    %c0_2 = arith.constant 0 : index
    %1 = vector.load %arg2[%c0_1, %c0_2] : memref<250x128xf32, #tpu.memory_space<vmem>>, vector<250x128xf32>
    %cst = arith.constant dense<0.000000e+00> : vector<64x128xf32>
    %2 = tpu.matmul %0, %1, %cst {dimension_numbers = #tpu.dot_dimension_numbers<[1], [0], [0], [1], [0, 0, 1, 1], [], []>} : vector<64x250xf32>, vector<250x128xf32>, vector<64x128xf32> -> vector<64x128xf32>
    %c0_3 = arith.constant 0 : index
    %c0_4 = arith.constant 0 : index
    %3 = vector.load %arg3[%c0_3, %c0_4] : memref<1x128xf32, #tpu.memory_space<vmem>>, vector<1x128xf32>
    %4 = vector.broadcast %3 : vector<1x128xf32> to vector<64x128xf32>
    %5 = arith.addf %2, %4 : vector<64x128xf32>
    %6 = vector.extract_strided_slice %5 {offsets = [0, 0], sizes = [16, 128], strides = [1, 1]} : vector<64x128xf32> to vector<16x128xf32>
    %7 = vector.extract_strided_slice %5 {offsets = [16, 0], sizes = [16, 128], strides = [1, 1]} : vector<64x128xf32> to vector<16x128xf32>
    %8 = vector.extract_strided_slice %5 {offsets = [32, 0], sizes = [16, 128], strides = [1, 1]} : vector<64x128xf32> to vector<16x128xf32>
    %9 = vector.extract_strided_slice %5 {offsets = [48, 0], sizes = [16, 128], strides = [1, 1]} : vector<64x128xf32> to vector<16x128xf32>
    %10 = arith.maximumf %6, %7 : vector<16x128xf32>
    %11 = arith.maximumf %8, %9 : vector<16x128xf32>
    %12 = arith.maximumf %10, %11 : vector<16x128xf32>
    %cst_5 = arith.constant 0.000000e+00 : f32
    %13 = vector.broadcast %cst_5 : f32 to vector<16x128xf32>
    %14 = arith.maximumf %12, %13 : vector<16x128xf32>
    %c0_6 = arith.constant 0 : index
    %c0_7 = arith.constant 0 : index
    %15 = vector.load %arg4[%c0_6, %c0_7] : memref<16x128xf32, #tpu.memory_space<vmem>>, vector<16x128xf32>
    tpu.vector_store %arg4[%c0_6, %c0_7], %14 {strides = array<i32>} : memref<16x128xf32, #tpu.memory_space<vmem>>, vector<16x128xf32>,
    return
  }
  func.func @transform_0(%arg0: i32) -> (i32, i32) {
    %c0_i32 = arith.constant 0 : i32
    %c0_i32_0 = arith.constant 0 : i32
    return %arg0, %c0_i32 : i32, i32
  }
  func.func @transform_1(%arg0: i32) -> (i32, i32) {
    %c0_i32 = arith.constant 0 : i32
    %c0_i32_0 = arith.constant 0 : i32
    %c0_i32_1 = arith.constant 0 : i32
    return %c0_i32, %c0_i32_0 : i32, i32
  }
  func.func @transform_2(%arg0: i32) -> (i32, i32) {
    %c0_i32 = arith.constant 0 : i32
    %c0_i32_0 = arith.constant 0 : i32
    %c0_i32_1 = arith.constant 0 : i32
    return %c0_i32, %c0_i32_0 : i32, i32
  }
  func.func @transform_3(%arg0: i32) -> (i32, i32) {
    %c0_i32 = arith.constant 0 : i32
    %c0_i32_0 = arith.constant 0 : i32
    return %arg0, %c0_i32 : i32, i32
  }
}

module attributes {stable_mosaic.version = 11 : i64} {
  func.func @_head_kernel(%arg0: memref<2x320xf32, #tpu.memory_space<vmem>>, %arg1: memref<320x128xf32, #tpu.memory_space<vmem>>, %arg2: memref<1x128xf32, #tpu.memory_space<vmem>>, %arg3: memref<128x128xf32, #tpu.memory_space<vmem>>, %arg4: memref<1x128xf32, #tpu.memory_space<vmem>>, %arg5: memref<2x128xf32, #tpu.memory_space<vmem>>) attributes {dimension_semantics = [], scalar_prefetch = 0 : i64, scratch_operands = 0 : i64, tpu.core_type = #tpu.core_type<tc>} {
    %c0 = arith.constant 0 : index
    %c0_0 = arith.constant 0 : index
    %0 = vector.load %arg0[%c0, %c0_0] : memref<2x320xf32, #tpu.memory_space<vmem>>, vector<2x320xf32>
    %c0_1 = arith.constant 0 : index
    %c0_2 = arith.constant 0 : index
    %1 = vector.load %arg1[%c0_1, %c0_2] : memref<320x128xf32, #tpu.memory_space<vmem>>, vector<320x128xf32>
    %cst = arith.constant dense<0.000000e+00> : vector<2x128xf32>
    %2 = tpu.matmul %0, %1, %cst {dimension_numbers = #tpu.dot_dimension_numbers<[1], [0], [0], [1], [0, 0, 1, 1], [], []>} : vector<2x320xf32>, vector<320x128xf32>, vector<2x128xf32> -> vector<2x128xf32>
    %c0_3 = arith.constant 0 : index
    %c0_4 = arith.constant 0 : index
    %3 = vector.load %arg2[%c0_3, %c0_4] : memref<1x128xf32, #tpu.memory_space<vmem>>, vector<1x128xf32>
    %4 = vector.broadcast %3 : vector<1x128xf32> to vector<2x128xf32>
    %5 = arith.addf %2, %4 : vector<2x128xf32>
    %cst_5 = arith.constant 0.000000e+00 : f32
    %6 = vector.broadcast %cst_5 : f32 to vector<2x128xf32>
    %7 = arith.maximumf %5, %6 : vector<2x128xf32>
    %c0_6 = arith.constant 0 : index
    %c0_7 = arith.constant 0 : index
    %8 = vector.load %arg3[%c0_6, %c0_7] : memref<128x128xf32, #tpu.memory_space<vmem>>, vector<128x128xf32>
    %cst_8 = arith.constant dense<0.000000e+00> : vector<2x128xf32>
    %9 = tpu.matmul %7, %8, %cst_8 {dimension_numbers = #tpu.dot_dimension_numbers<[1], [0], [0], [1], [0, 0, 1, 1], [], []>} : vector<2x128xf32>, vector<128x128xf32>, vector<2x128xf32> -> vector<2x128xf32>
    %c0_9 = arith.constant 0 : index
    %c0_10 = arith.constant 0 : index
    %10 = vector.load %arg4[%c0_9, %c0_10] : memref<1x128xf32, #tpu.memory_space<vmem>>, vector<1x128xf32>
    %11 = vector.broadcast %10 : vector<1x128xf32> to vector<2x128xf32>
    %12 = arith.addf %9, %11 : vector<2x128xf32>
    %cst_11 = arith.constant dense<0xFF800000> : vector<2xf32>
    %13 = vector.multi_reduction <maximumf>, %12, %cst_11 [1] : vector<2x128xf32> to vector<2xf32>
    %14 = vector.shape_cast %13 : vector<2xf32> to vector<2x1xf32>
    %15 = vector.broadcast %14 : vector<2x1xf32> to vector<2x128xf32>
    %16 = arith.subf %12, %15 : vector<2x128xf32>
    %17 = math.exp %16 : vector<2x128xf32>
    %cst_12 = arith.constant dense<0.000000e+00> : vector<2xf32>
    %18 = vector.multi_reduction <add>, %17, %cst_12 [1] : vector<2x128xf32> to vector<2xf32>
    %19 = vector.shape_cast %18 : vector<2xf32> to vector<2x1xf32>
    %20 = math.log %19 : vector<2x1xf32>
    %21 = arith.addf %20, %14 : vector<2x1xf32>
    %22 = vector.broadcast %21 : vector<2x1xf32> to vector<2x128xf32>
    %23 = arith.subf %12, %22 : vector<2x128xf32>
    %c0_13 = arith.constant 0 : index
    %c0_14 = arith.constant 0 : index
    %24 = vector.load %arg5[%c0_13, %c0_14] : memref<2x128xf32, #tpu.memory_space<vmem>>, vector<2x128xf32>
    tpu.vector_store %arg5[%c0_13, %c0_14], %23 {strides = array<i32>} : memref<2x128xf32, #tpu.memory_space<vmem>>, vector<2x128xf32>,
    return
  }
}

</mosaic_0001>

<llo_original>
// kernel: net_forward.3
$region0: #{net_forward.3}
  #allocation0 [shape = 'u32[]', space=smem, size = 0x4, offset = 0x4, fixed_abs, tag = 'smem constant byte address 0x4 - core index']
  #allocation1 [shape = 'u32[144,128]{1,0:T(1,128)}', space=vmem, size = 0x12000, scoped, tag = 'internal scratch']
  %s0 = inlined_call_operand.vmem [shape: f32[1152,25], index: 0, kind: input, shape index: {}]
  %s1 = inlined_call_operand.vmem [shape: f32[25,128], index: 1, kind: input, shape index: {}]
  %s2 = inlined_call_operand.vmem [shape: f32[1,128], index: 2, kind: input, shape index: {}]
  %s3 = inlined_call_operand.vmem [shape: f32[288,128], index: 3, kind: output, shape index: {}]
  %s4 = sld [smem:[#allocation0]]
  $region45: #{net_forward.3} parent=0
    _
  %s6 = ssub.s32 1, %s4
  %s7 = scalar_select 0, %s6, %s4
  loop: start=0, step=1, limit=4
  $region2: #{net_forward.3} parent=0 // loop_pre_header
    _
  $region3: #{net_forward.3} parent=0 // loop_header
    %s9 = sphi 0, %s13
    %p10 = scmp.ge.s32.totalorder %s9, 4
    %s19 = sphi 0, %s21
    %s22 = sphi 0, %s19
    %s23 = sphi 0, %s22
    %s39 = sphi 0, %s23
    %s43 = sphi 0, %s43
    %s45 = sphi 0, %s43
    %s46 = sphi 0, %s45
    %s60 = sphi 0, %s46
    %s64 = sphi 0, %s64
    %s66 = sphi 0, %s64
    %s67 = sphi 0, %s66
    %s81 = sphi 0, %s67
    %s87 = sphi 0, %s89
    %s90 = sphi 0, %s87
    %s91 = sphi 0, %s90
    %s107 = sphi 0, %s91
  $region4: #{net_forward.3} parent=0 // loop_header_branch
    %12 = sbr.rel (%p10) target = $region8
  $region5: #{net_forward.3} parent=0 // loop_body
    %s14 = ssub.s32 %s9, 1
    %s15 = ssub.s32 %s9, 2
    %s16 = sadd.s32 %s9, 1
    %s17 = ssub.s32 %s9, %s16
    %p18 = scmp.eq.s32.totalorder %s17, 0
    %s20 = sadd.s32 %s19, 1
    %s21 = scalar_select %p18, %s19, %s20
    %p24 = pneg %p18
    %p25 = scmp.eq.s32.totalorder %s9, 1
    %p26 = por %p24, %p25
    %p27 = scmp.ne.s32.totalorder %s19, %s22
    %p28 = scmp.eq.s32.totalorder %s9, 0
    %p29 = por %p27, %p28
    %p30 = scmp.ne.s32.totalorder %s19, %s22
    %p31 = scmp.eq.s32.totalorder %s14, 1
    %p32 = por %p30, %p31
    %p33 = scmp.ne.s32.totalorder %s22, %s23
    %p34 = scmp.eq.s32.totalorder %s14, 0
    %p35 = por %p33, %p34
    %p36 = scmp.ne.s32.totalorder %s22, %s23
    %p37 = scmp.eq.s32.totalorder %s15, 1
    %p38 = por %p36, %p37
    %p40 = scmp.ne.s32.totalorder %s23, %s39
    %p41 = scmp.eq.s32.totalorder %s15, 0
    %p42 = por %p40, %p41
    %s44 = sadd.s32 %s43, 1
    %p47 = scmp.eq.s32.totalorder %s9, 1
    %p48 = scmp.ne.s32.totalorder %s43, %s45
    %p49 = scmp.eq.s32.totalorder %s9, 0
    %p50 = por %p48, %p49
    %p51 = scmp.ne.s32.totalorder %s43, %s45
    %p52 = scmp.eq.s32.totalorder %s14, 1
    %p53 = por %p51, %p52
    %p54 = scmp.ne.s32.totalorder %s45, %s46
    %p55 = scmp.eq.s32.totalorder %s14, 0
    %p56 = por %p54, %p55
    %p57 = scmp.ne.s32.totalorder %s45, %s46
    %p58 = scmp.eq.s32.totalorder %s15, 1
    %p59 = por %p57, %p58
    %p61 = scmp.ne.s32.totalorder %s46, %s60
    %p62 = scmp.eq.s32.totalorder %s15, 0
    %p63 = por %p61, %p62
    %s65 = sadd.s32 %s64, 1
    %p68 = scmp.eq.s32.totalorder %s9, 1
    %p69 = scmp.ne.s32.totalorder %s64, %s66
    %p70 = scmp.eq.s32.totalorder %s9, 0
    %p71 = por %p69, %p70
    %p72 = scmp.ne.s32.totalorder %s64, %s66
    %p73 = scmp.eq.s32.totalorder %s14, 1
    %p74 = por %p72, %p73
    %p75 = scmp.ne.s32.totalorder %s66, %s67
    %p76 = scmp.eq.s32.totalorder %s14, 0
    %p77 = por %p75, %p76
    %p78 = scmp.ne.s32.totalorder %s66, %s67
    %p79 = scmp.eq.s32.totalorder %s15, 1
    %p80 = por %p78, %p79
    %p82 = scmp.ne.s32.totalorder %s67, %s81
    %p83 = scmp.eq.s32.totalorder %s15, 0
    %p84 = por %p82, %p83
    %s85 = ssub.s32 %s9, %s16
    %p86 = scmp.eq.s32.totalorder %s85, 0
    %s88 = sadd.s32 %s87, 1
    %s89 = scalar_select %p86, %s87, %s88
    %p92 = pneg %p86
    %p93 = scmp.eq.s32.totalorder %s9, 1
    %p94 = por %p92, %p93
    %p95 = scmp.ne.s32.totalorder %s87, %s90
    %p96 = scmp.eq.s32.totalorder %s9, 0
    %p97 = por %p95, %p96
    %p98 = scmp.ne.s32.totalorder %s87, %s90
    %p99 = scmp.eq.s32.totalorder %s14, 1
    %p100 = por %p98, %p99
    %p101 = scmp.ne.s32.totalorder %s90, %s91
    %p102 = scmp.eq.s32.totalorder %s14, 0
    %p103 = por %p101, %p102
    %p104 = scmp.ne.s32.totalorder %s90, %s91
    %p105 = scmp.eq.s32.totalorder %s15, 1
    %p106 = por %p104, %p105
    %p108 = scmp.ne.s32.totalorder %s91, %s107
    %p109 = scmp.eq.s32.totalorder %s15, 0
    %p110 = por %p108, %p109
    %p111 = scmp.le.s32.totalorder 1, %s9
    %p112 = scmp.lt.s32.totalorder %s9, 3
    %p113 = pnand %p111, %p112
    %p114 = pneg %p113
    // Predicated region
    $region9: #{net_forward.3} parent=5 // pred_check
      _
    $region10: #{net_forward.3} parent=5 // pred_check_branch
      %116 = sbr.rel (%p113) target = $region12
    $region11: #{net_forward.3} parent=5 // pred_region
      %s117 = ssub.s32 %s9, 1
      // Predicated region
      $region13: #{net_forward.3} parent=11 // pred_check
        %p118 = pneg %p56
      $region14: #{net_forward.3} parent=11 // pred_check_branch
        %120 = sbr.rel (%p118) target = $region16
      $region15: #{net_forward.3} parent=11 // pred_region
        _
      $region16: #{net_forward.3} parent=11 // pred_fallthru
        _
      // Predicated region
      $region17: #{net_forward.3} parent=11 // pred_check
        %p121 = pneg %p77
      $region18: #{net_forward.3} parent=11 // pred_check_branch
        %123 = sbr.rel (%p121) target = $region20
      $region19: #{net_forward.3} parent=11 // pred_region
        _
      $region20: #{net_forward.3} parent=11 // pred_fallthru
        _
    $region12: #{net_forward.3} parent=5 // pred_fallthru
      _
    %p124 = scmp.lt.s32.totalorder %s9, 2
    // Predicated region
    $region21: #{net_forward.3} parent=5 // pred_check
      %p125 = pneg %p124
    $region22: #{net_forward.3} parent=5 // pred_check_branch
      %127 = sbr.rel (%p125) target = $region24
    $region23: #{net_forward.3} parent=5 // pred_region
      // Predicated region
      $region25: #{net_forward.3} parent=23 // pred_check
        %p128 = pneg %p29
      $region26: #{net_forward.3} parent=23 // pred_check_branch
        %130 = sbr.rel (%p128) target = $region28
      $region27: #{net_forward.3} parent=23 // pred_region
        %s131 = smul.u32 72, %s9
        %p132 = scmp.lt.s32.totalorder %s131, 143
        %s133 = scalar_select %p132, %s131, 143
        %s134 = smul.addr %s133, 8
        %s135 = scalar_lea.vmem %s0, %s134
        %s136 = smul.u32 72, %s9
      $region28: #{net_forward.3} parent=23 // pred_fallthru
        _
    $region24: #{net_forward.3} parent=5 // pred_fallthru
      _
    %p137 = scmp.le.s32.totalorder 1, %s9
    %p138 = scmp.lt.s32.totalorder %s9, 3
    %p139 = pnand %p137, %p138
    %p140 = pneg %p139
    // Predicated region
    $region29: #{net_forward.3} parent=5 // pred_check
      _
    $region30: #{net_forward.3} parent=5 // pred_check_branch
      %142 = sbr.rel (%p139) target = $region32
    $region31: #{net_forward.3} parent=5 // pred_region
      %s143 = ssub.s32 %s9, 1
      %s144 = smul.u32 72, %s14
      %p145 = scmp.lt.s32.totalorder %s144, 143
      %s146 = scalar_select %p145, %s144, 143
      %s147 = smul.addr %s146, 8
      %s148 = scalar_lea.vmem %s0, %s147
      %p149 = pneg %p35
      %p150 = pneg %p32
      %p151 = pneg %p56
      %p152 = pneg %p53
      %p153 = pneg %p77
      %p154 = pneg %p74
      %p155 = pneg %p103
      %p156 = pneg %p100
      %s157 = smul.u32 18, %s14
      %p158 = scmp.lt.s32.totalorder %s157, 35
      %s159 = scalar_select %p158, %s157, 35
      %s160 = smul.addr %s159, 8
      %s161 = scalar_lea.vmem %s3, %s160
      %s162 = smul.u32 72, %s14
      %p163 = scmp.lt.s32.totalorder %s162, 143
      %s164 = scalar_select %p163, %s162, 143
      %s165 = smul.addr %s164, 8
      %s166 = scalar_lea.vmem %s0, %s165
      %s167 = smul.u32 72, %s14
      %s168 = smul.u32 18, %s14
      %p169 = scmp.lt.s32.totalorder %s168, 35
      %s170 = scalar_select %p169, %s168, 35
      %s171 = smul.addr %s170, 8
      %s172 = scalar_lea.vmem %s3, %s171
      %s173 = smul.u32 18, %s14
      %v174 = vld [vmem:[%s166] sm:$0xff]
      %v175 = vld [vmem:[%s166 + $0x8] sm:$0xff]
      %v176 = vld [vmem:[%s166 + $0x10] sm:$0xff]
      %v177 = vld [vmem:[%s166 + $0x18] sm:$0xff]
      %v178 = vld [vmem:[%s166 + $0x20] sm:$0xff]
      %v179 = vld [vmem:[%s166 + $0x28] sm:$0xff]
      %v180 = vld [vmem:[%s166 + $0x30] sm:$0xff]
      %v181 = vld [vmem:[%s166 + $0x38] sm:$0xff]
      %v182 = vld [vmem:[%s166 + $0x40] sm:$0xff]
      %v183 = vld [vmem:[%s166 + $0x48] sm:$0xff]
      %v184 = vld [vmem:[%s166 + $0x50] sm:$0xff]
      %v185 = vld [vmem:[%s166 + $0x58] sm:$0xff]
      %v186 = vld [vmem:[%s166 + $0x60] sm:$0xff]
      %v187 = vld [vmem:[%s166 + $0x68] sm:$0xff]
      %v188 = vld [vmem:[%s166 + $0x70] sm:$0xff]
      %v189 = vld [vmem:[%s166 + $0x78] sm:$0xff]
      %v190 = vld [vmem:[%s166 + $0x80] sm:$0xff]
      %v191 = vld [vmem:[%s166 + $0x88] sm:$0xff]
      %v192 = vld [vmem:[%s166 + $0x90] sm:$0xff]
      %v193 = vld [vmem:[%s166 + $0x98] sm:$0xff]
      %v194 = vld [vmem:[%s166 + $0xa0] sm:$0xff]
      %v195 = vld [vmem:[%s166 + $0xa8] sm:$0xff]
      %v196 = vld [vmem:[%s166 + $0xb0] sm:$0xff]
      %v197 = vld [vmem:[%s166 + $0xb8] sm:$0xff]
      %v198 = vld [vmem:[%s166 + $0xc0] sm:$0xff]
      %v199 = vld [vmem:[%s166 + $0xc8] sm:$0xff]
      %v200 = vld [vmem:[%s166 + $0xd0] sm:$0xff]
      %v201 = vld [vmem:[%s166 + $0xd8] sm:$0xff]
      %v202 = vld [vmem:[%s166 + $0xe0] sm:$0xff]
      %v203 = vld [vmem:[%s166 + $0xe8] sm:$0xff]
      %v204 = vld [vmem:[%s166 + $0xf0] sm:$0xff]
      %v205 = vld [vmem:[%s166 + $0xf8] sm:$0xff]
      %v206 = vld [vmem:[%s166 + $0x100] sm:$0xff]
      %v207 = vld [vmem:[%s166 + $0x108] sm:$0xff]
      %v208 = vld [vmem:[%s166 + $0x110] sm:$0xff]
      %v209 = vld [vmem:[%s166 + $0x118] sm:$0xff]
      %v210 = vld [vmem:[%s166 + $0x120] sm:$0xff]
      %v211 = vld [vmem:[%s166 + $0x128] sm:$0xff]
      %v212 = vld [vmem:[%s166 + $0x130] sm:$0xff]
      %v213 = vld [vmem:[%s166 + $0x138] sm:$0xff]
      %v214 = vld [vmem:[%s166 + $0x140] sm:$0xff]
      %v215 = vld [vmem:[%s166 + $0x148] sm:$0xff]
      %v216 = vld [vmem:[%s166 + $0x150] sm:$0xff]
      %v217 = vld [vmem:[%s166 + $0x158] sm:$0xff]
      %v218 = vld [vmem:[%s166 + $0x160] sm:$0xff]
      %v219 = vld [vmem:[%s166 + $0x168] sm:$0xff]
      %v220 = vld [vmem:[%s166 + $0x170] sm:$0xff]
      %v221 = vld [vmem:[%s166 + $0x178] sm:$0xff]
      %v222 = vld [vmem:[%s166 + $0x180] sm:$0xff]
      %v223 = vld [vmem:[%s166 + $0x188] sm:$0xff]
      %v224 = vld [vmem:[%s166 + $0x190] sm:$0xff]
      %v225 = vld [vmem:[%s166 + $0x198] sm:$0xff]
      %v226 = vld [vmem:[%s166 + $0x1a0] sm:$0xff]
      %v227 = vld [vmem:[%s166 + $0x1a8] sm:$0xff]
      %v228 = vld [vmem:[%s166 + $0x1b0] sm:$0xff]
      %v229 = vld [vmem:[%s166 + $0x1b8] sm:$0xff]
      %v230 = vld [vmem:[%s166 + $0x1c0] sm:$0xff]
      %v231 = vld [vmem:[%s166 + $0x1c8] sm:$0xff]
      %v232 = vld [vmem:[%s166 + $0x1d0] sm:$0xff]
      %v233 = vld [vmem:[%s166 + $0x1d8] sm:$0xff]
      %v234 = vld [vmem:[%s166 + $0x1e0] sm:$0xff]
      %v235 = vld [vmem:[%s166 + $0x1e8] sm:$0xff]
      %v236 = vld [vmem:[%s166 + $0x1f0] sm:$0xff]
      %v237 = vld [vmem:[%s166 + $0x1f8] sm:$0xff]
      %v238 = vld [vmem:[%s166 + $0x200] sm:$0xff]
      %v239 = vld [vmem:[%s166 + $0x208] sm:$0xff]
      %v240 = vld [vmem:[%s166 + $0x210] sm:$0xff]
      %v241 = vld [vmem:[%s166 + $0x218] sm:$0xff]
      %v242 = vld [vmem:[%s166 + $0x220] sm:$0xff]
      %v243 = vld [vmem:[%s166 + $0x228] sm:$0xff]
      %v244 = vld [vmem:[%s166 + $0x230] sm:$0xff]
      %v245 = vld [vmem:[%s166 + $0x238] sm:$0xff]
      %v246 = vld [vmem:[%s1] sm:$0xff]
      %v247 = vld [vmem:[%s1 + $0x8] sm:$0xff]
      %v248 = vld [vmem:[%s1 + $0x10] sm:$0xff]
      %v249 = vld [vmem:[%s1 + $0x18] sm:$0x1]
      %v250 = vld [vmem:[%s2] sm:$0x1]
      %v252 = vlaneseq
      %v253 = vshrl.u32 %v252, 7
      %v254 = vsub.s32 0, %v253
      %v255 = vrot.slane %v250, %v254
      %vm257 = vcmask 203776
      %v259 = vsel %vm257, %v174, 0
      %v262 = vsel %vm257, %v175, 0
      %v265 = vsel %vm257, %v176, 0
      %v268 = vsel %vm257, %v177, 0
      %v271 = vsel %vm257, %v178, 0
      %v274 = vsel %vm257, %v179, 0
      %v277 = vsel %vm257, %v180, 0
      %v280 = vsel %vm257, %v181, 0
      %v283 = vsel %vm257, %v182, 0
      %v286 = vsel %vm257, %v183, 0
      %v289 = vsel %vm257, %v184, 0
      %v292 = vsel %vm257, %v185, 0
      %v295 = vsel %vm257, %v186, 0
      %v298 = vsel %vm257, %v187, 0
      %v301 = vsel %vm257, %v188, 0
      %v304 = vsel %vm257, %v189, 0
      %v307 = vsel %vm257, %v190, 0
      %v310 = vsel %vm257, %v191, 0
      %v313 = vsel %vm257, %v192, 0
      %v316 = vsel %vm257, %v193, 0
      %v319 = vsel %vm257, %v194, 0
      %v322 = vsel %vm257, %v195, 0
      %v325 = vsel %vm257, %v196, 0
      %v328 = vsel %vm257, %v197, 0
      %v331 = vsel %vm257, %v198, 0
      %v334 = vsel %vm257, %v199, 0
      %v337 = vsel %vm257, %v200, 0
      %v340 = vsel %vm257, %v201, 0
      %v343 = vsel %vm257, %v202, 0
      %v346 = vsel %vm257, %v203, 0
      %v349 = vsel %vm257, %v204, 0
      %v352 = vsel %vm257, %v205, 0
      %v355 = vsel %vm257, %v206, 0
      %v358 = vsel %vm257, %v207, 0
      %v361 = vsel %vm257, %v208, 0
      %v364 = vsel %vm257, %v209, 0
      %v367 = vsel %vm257, %v210, 0
      %v370 = vsel %vm257, %v211, 0
      %v373 = vsel %vm257, %v212, 0
      %v376 = vsel %vm257, %v213, 0
      %v379 = vsel %vm257, %v214, 0
      %v382 = vsel %vm257, %v215, 0
      %v385 = vsel %vm257, %v216, 0
      %v388 = vsel %vm257, %v217, 0
      %v391 = vsel %vm257, %v218, 0
      %v394 = vsel %vm257, %v219, 0
      %v397 = vsel %vm257, %v220, 0
      %v400 = vsel %vm257, %v221, 0
      %v403 = vsel %vm257, %v222, 0
      %v406 = vsel %vm257, %v223, 0
      %v409 = vsel %vm257, %v224, 0
      %v412 = vsel %vm257, %v225, 0
      %v415 = vsel %vm257, %v226, 0
      %v418 = vsel %vm257, %v227, 0
      %v421 = vsel %vm257, %v228, 0
      %v424 = vsel %vm257, %v229, 0
      %v427 = vsel %vm257, %v230, 0
      %v430 = vsel %vm257, %v231, 0
      %v433 = vsel %vm257, %v232, 0
      %v436 = vsel %vm257, %v233, 0
      %v439 = vsel %vm257, %v234, 0
      %v442 = vsel %vm257, %v235, 0
      %v445 = vsel %vm257, %v236, 0
      %v448 = vsel %vm257, %v237, 0
      %v451 = vsel %vm257, %v238, 0
      %v454 = vsel %vm257, %v239, 0
      %v457 = vsel %vm257, %v240, 0
      %v460 = vsel %vm257, %v241, 0
      %v463 = vsel %vm257, %v242, 0
      %v466 = vsel %vm257, %v243, 0
      %v469 = vsel %vm257, %v244, 0
      %v472 = vsel %vm257, %v245, 0
      %vm474 = vcmask 1040384
      %v476 = vsel %vm474, %v249, 0
      %478 = vmatprep.subr.mxu0 0.0
      %479 = vmatpush1.msra.mxu0 0.0
      %480 = vmatprep.subr.mxu0 0.0
      %481 = vmatpush1.msra.mxu0 0.0
      %482 = vmatprep.subr.mxu0 0.0
      %483 = vmatpush1.msra.mxu0 0.0
      %484 = vmatprep.subr.mxu0 0.0
      %485 = vmatpush1.msra.mxu0 0.0
      %486 = vmatprep.subr.mxu0 0.0
      %487 = vmatpush1.msra.mxu0 0.0
      %488 = vmatprep.subr.mxu0 0.0
      %489 = vmatpush1.msra.mxu0 0.0
      %490 = vmatprep.subr.mxu0 0.0
      %491 = vmatpush1.msra.mxu0 0.0
      %492 = vmatprep.subr.mxu0 0.0
      %493 = vmatpush1.msra.mxu0 0.0
      %494 = vmatprep.subr.mxu0 0.0
      %495 = vmatpush1.msra.mxu0 0.0
      %496 = vmatprep.subr.mxu0 0.0
      %497 = vmatpush1.msra.mxu0 0.0
      %498 = vmatprep.subr.mxu0 0.0
      %499 = vmatpush1.msra.mxu0 0.0
      %500 = vmatprep.subr.mxu0 0.0
      %501 = vmatpush1.msra.mxu0 0.0
      %502 = vmatprep.subr.mxu0 0.0
      %503 = vmatpush1.msra.mxu0 %v476
      %504 = vmatprep.subr.mxu0 0.0
      %505 = vmatpush1.msra.mxu0 %v248
      %506 = vmatprep.subr.mxu0 0.0
      %507 = vmatpush1.msra.mxu0 %v247
      %508 = vmatprep.subr.mxu0 0.0
      %509 = vmatpush1.msra.mxu0 %v246
      %510 = vmatprep.subr.mxu0 0.0
      %511 = vmatpush2.msra.mxu0 0.0
      %512 = vmatprep.subr.mxu0 0.0
      %513 = vmatpush2.msra.mxu0 0.0
      %514 = vmatprep.subr.mxu0 0.0
      %515 = vmatpush2.msra.mxu0 0.0
      %516 = vmatprep.subr.mxu0 0.0
      %517 = vmatpush2.msra.mxu0 0.0
      %518 = vmatprep.subr.mxu0 0.0
      %519 = vmatpush2.msra.mxu0 0.0
      %520 = vmatprep.subr.mxu0 0.0
      %521 = vmatpush2.msra.mxu0 0.0
      %522 = vmatprep.subr.mxu0 0.0
      %523 = vmatpush2.msra.mxu0 0.0
      %524 = vmatprep.subr.mxu0 0.0
      %525 = vmatpush2.msra.mxu0 0.0
      %526 = vmatprep.subr.mxu0 0.0
      %527 = vmatpush2.msra.mxu0 0.0
      %528 = vmatprep.subr.mxu0 0.0
      %529 = vmatpush2.msra.mxu0 0.0
      %530 = vmatprep.subr.mxu0 0.0
      %531 = vmatpush2.msra.mxu0 0.0
      %532 = vmatprep.subr.mxu0 0.0
      %533 = vmatpush2.msra.mxu0 0.0
      %534 = vmatprep.subr.mxu0 0.0
      %535 = vmatpush2.msra.mxu0 0.0
      %536 = vmatprep.subr.mxu0 0.0
      %537 = vmatpush2.msra.mxu0 0.0
      %538 = vmatprep.subr.mxu0 0.0
      %539 = vmatpush2.msra.mxu0 0.0
      %540 = vmatprep.subr.mxu0 0.0
      %541 = vmatpush2.msra.mxu0 0.0
      %542 = vmatprep.mubr.f32.mxu0 0.0
      %543 = vmatmul.mubr.f32.gmra.mxu0 %v259
      %v544 = vpop.f32.mrf.mxu0
      %v545 = vadd.f32 %v255, %v544
      %v546 = vpop.f32.mrf.mxu0
      %547 = vmatprep.mubr.f32.mxu0 0.0
      %548 = vmatmul.mubr.f32.gmra.mxu0 %v262
      %v549 = vpop.f32.mrf.mxu0
      %v550 = vadd.f32 %v255, %v549
      %v551 = vpop.f32.mrf.mxu0
      %552 = vmatprep.mubr.f32.mxu0 0.0
      %553 = vmatmul.mubr.f32.gmra.mxu0 %v265
      %v554 = vpop.f32.mrf.mxu0
      %v555 = vadd.f32 %v255, %v554
      %v556 = vpop.f32.mrf.mxu0
      %557 = vmatprep.mubr.f32.mxu0 0.0
      %558 = vmatmul.mubr.f32.gmra.mxu0 %v268
      %v559 = vpop.f32.mrf.mxu0
      %v560 = vadd.f32 %v255, %v559
      %v561 = vpop.f32.mrf.mxu0
      %562 = vmatprep.mubr.f32.mxu0 0.0
      %563 = vmatmul.mubr.f32.gmra.mxu0 %v271
      %v564 = vpop.f32.mrf.mxu0
      %v565 = vadd.f32 %v255, %v564
      %v566 = vpop.f32.mrf.mxu0
      %567 = vmatprep.mubr.f32.mxu0 0.0
      %568 = vmatmul.mubr.f32.gmra.mxu0 %v274
      %v569 = vpop.f32.mrf.mxu0
      %v570 = vadd.f32 %v255, %v569
      %v571 = vpop.f32.mrf.mxu0
      %572 = vmatprep.mubr.f32.mxu0 0.0
      %573 = vmatmul.mubr.f32.gmra.mxu0 %v277
      %v574 = vpop.f32.mrf.mxu0
      %v575 = vadd.f32 %v255, %v574
      %v576 = vpop.f32.mrf.mxu0
      %577 = vmatprep.mubr.f32.mxu0 0.0
      %578 = vmatmul.mubr.f32.gmra.mxu0 %v280
      %v579 = vpop.f32.mrf.mxu0
      %v580 = vadd.f32 %v255, %v579
      %v581 = vpop.f32.mrf.mxu0
      %582 = vmatprep.mubr.f32.mxu0 0.0
      %583 = vmatmul.mubr.f32.gmra.mxu0 %v283
      %v584 = vpop.f32.mrf.mxu0
      %v585 = vadd.f32 %v255, %v584
      %v586 = vpop.f32.mrf.mxu0
      %587 = vmatprep.mubr.f32.mxu0 0.0
      %588 = vmatmul.mubr.f32.gmra.mxu0 %v286
      %v589 = vpop.f32.mrf.mxu0
      %v590 = vadd.f32 %v255, %v589
      %v591 = vpop.f32.mrf.mxu0
      %592 = vmatprep.mubr.f32.mxu0 0.0
      %593 = vmatmul.mubr.f32.gmra.mxu0 %v289
      %v594 = vpop.f32.mrf.mxu0
      %v595 = vadd.f32 %v255, %v594
      %v596 = vpop.f32.mrf.mxu0
      %597 = vmatprep.mubr.f32.mxu0 0.0
      %598 = vmatmul.mubr.f32.gmra.mxu0 %v292
      %v599 = vpop.f32.mrf.mxu0
      %v600 = vadd.f32 %v255, %v599
      %v601 = vpop.f32.mrf.mxu0
      %602 = vmatprep.mubr.f32.mxu0 0.0
      %603 = vmatmul.mubr.f32.gmra.mxu0 %v295
      %v604 = vpop.f32.mrf.mxu0
      %v605 = vadd.f32 %v255, %v604
      %v606 = vpop.f32.mrf.mxu0
      %607 = vmatprep.mubr.f32.mxu0 0.0
      %608 = vmatmul.mubr.f32.gmra.mxu0 %v298
      %v609 = vpop.f32.mrf.mxu0
      %v610 = vadd.f32 %v255, %v609
      %v611 = vpop.f32.mrf.mxu0
      %612 = vmatprep.mubr.f32.mxu0 0.0
      %613 = vmatmul.mubr.f32.gmra.mxu0 %v301
      %v614 = vpop.f32.mrf.mxu0
      %v615 = vadd.f32 %v255, %v614
      %v616 = vpop.f32.mrf.mxu0
      %617 = vmatprep.mubr.f32.mxu0 0.0
      %618 = vmatmul.mubr.f32.gmra.mxu0 %v304
      %v619 = vpop.f32.mrf.mxu0
      %v620 = vadd.f32 %v255, %v619
      %v621 = vpop.f32.mrf.mxu0
      %622 = vmatprep.mubr.f32.mxu0 0.0
      %623 = vmatmul.mubr.f32.gmra.mxu0 %v307
      %v624 = vpop.f32.mrf.mxu0
      %v625 = vadd.f32 %v255, %v624
      %v626 = vpop.f32.mrf.mxu0
      %627 = vmatprep.mubr.f32.mxu0 0.0
      %628 = vmatmul.mubr.f32.gmra.mxu0 %v310
      %v629 = vpop.f32.mrf.mxu0
      %v630 = vadd.f32 %v255, %v629
      %v631 = vpop.f32.mrf.mxu0
      %632 = vmatprep.mubr.f32.mxu0 0.0
      %633 = vmatmul.mubr.f32.gmra.mxu0 %v313
      %v634 = vpop.f32.mrf.mxu0
      %v635 = vadd.f32 %v255, %v634
      %v636 = vpop.f32.mrf.mxu0
      %637 = vmatprep.mubr.f32.mxu0 0.0
      %638 = vmatmul.mubr.f32.gmra.mxu0 %v316
      %v639 = vpop.f32.mrf.mxu0
      %v640 = vadd.f32 %v255, %v639
      %v641 = vpop.f32.mrf.mxu0
      %642 = vmatprep.mubr.f32.mxu0 0.0
      %643 = vmatmul.mubr.f32.gmra.mxu0 %v319
      %v644 = vpop.f32.mrf.mxu0
      %v645 = vadd.f32 %v255, %v644
      %v646 = vpop.f32.mrf.mxu0
      %647 = vmatprep.mubr.f32.mxu0 0.0
      %648 = vmatmul.mubr.f32.gmra.mxu0 %v322
      %v649 = vpop.f32.mrf.mxu0
      %v650 = vadd.f32 %v255, %v649
      %v651 = vpop.f32.mrf.mxu0
      %652 = vmatprep.mubr.f32.mxu0 0.0
      %653 = vmatmul.mubr.f32.gmra.mxu0 %v325
      %v654 = vpop.f32.mrf.mxu0
      %v655 = vadd.f32 %v255, %v654
      %v656 = vpop.f32.mrf.mxu0
      %657 = vmatprep.mubr.f32.mxu0 0.0
      %658 = vmatmul.mubr.f32.gmra.mxu0 %v328
      %v659 = vpop.f32.mrf.mxu0
      %v660 = vadd.f32 %v255, %v659
      %v661 = vpop.f32.mrf.mxu0
      %662 = vmatprep.mubr.f32.mxu0 0.0
      %663 = vmatmul.mubr.f32.gmra.mxu0 %v331
      %v664 = vpop.f32.mrf.mxu0
      %v665 = vadd.f32 %v255, %v664
      %v666 = vpop.f32.mrf.mxu0
      %667 = vmatprep.mubr.f32.mxu0 0.0
      %668 = vmatmul.mubr.f32.gmra.mxu0 %v334
      %v669 = vpop.f32.mrf.mxu0
      %v670 = vadd.f32 %v255, %v669
      %v671 = vpop.f32.mrf.mxu0
      %672 = vmatprep.mubr.f32.mxu0 0.0
      %673 = vmatmul.mubr.f32.gmra.mxu0 %v337
      %v674 = vpop.f32.mrf.mxu0
      %v675 = vadd.f32 %v255, %v674
      %v676 = vpop.f32.mrf.mxu0
      %677 = vmatprep.mubr.f32.mxu0 0.0
      %678 = vmatmul.mubr.f32.gmra.mxu0 %v340
      %v679 = vpop.f32.mrf.mxu0
      %v680 = vadd.f32 %v255, %v679
      %v681 = vpop.f32.mrf.mxu0
      %682 = vmatprep.mubr.f32.mxu0 0.0
      %683 = vmatmul.mubr.f32.gmra.mxu0 %v343
      %v684 = vpop.f32.mrf.mxu0
      %v685 = vadd.f32 %v255, %v684
      %v686 = vpop.f32.mrf.mxu0
      %687 = vmatprep.mubr.f32.mxu0 0.0
      %688 = vmatmul.mubr.f32.gmra.mxu0 %v346
      %v689 = vpop.f32.mrf.mxu0
      %v690 = vadd.f32 %v255, %v689
      %v691 = vpop.f32.mrf.mxu0
      %692 = vmatprep.mubr.f32.mxu0 0.0
      %693 = vmatmul.mubr.f32.gmra.mxu0 %v349
      %v694 = vpop.f32.mrf.mxu0
      %v695 = vadd.f32 %v255, %v694
      %v696 = vpop.f32.mrf.mxu0
      %697 = vmatprep.mubr.f32.mxu0 0.0
      %698 = vmatmul.mubr.f32.gmra.mxu0 %v352
      %v699 = vpop.f32.mrf.mxu0
      %v700 = vadd.f32 %v255, %v699
      %v701 = vpop.f32.mrf.mxu0
      %702 = vmatprep.mubr.f32.mxu0 0.0
      %703 = vmatmul.mubr.f32.gmra.mxu0 %v355
      %v704 = vpop.f32.mrf.mxu0
      %v705 = vadd.f32 %v255, %v704
      %v706 = vpop.f32.mrf.mxu0
      %707 = vmatprep.mubr.f32.mxu0 0.0
      %708 = vmatmul.mubr.f32.gmra.mxu0 %v358
      %v709 = vpop.f32.mrf.mxu0
      %v710 = vadd.f32 %v255, %v709
      %v711 = vpop.f32.mrf.mxu0
      %712 = vmatprep.mubr.f32.mxu0 0.0
      %713 = vmatmul.mubr.f32.gmra.mxu0 %v361
      %v714 = vpop.f32.mrf.mxu0
      %v715 = vadd.f32 %v255, %v714
      %v716 = vpop.f32.mrf.mxu0
      %717 = vmatprep.mubr.f32.mxu0 0.0
      %718 = vmatmul.mubr.f32.gmra.mxu0 %v364
      %v719 = vpop.f32.mrf.mxu0
      %v720 = vadd.f32 %v255, %v719
      %v721 = vpop.f32.mrf.mxu0
      %722 = vmatprep.mubr.f32.mxu0 0.0
      %723 = vmatmul.mubr.f32.gmra.mxu0 %v367
      %v724 = vpop.f32.mrf.mxu0
      %v725 = vadd.f32 %v255, %v724
      %v726 = vpop.f32.mrf.mxu0
      %727 = vmatprep.mubr.f32.mxu0 0.0
      %728 = vmatmul.mubr.f32.gmra.mxu0 %v370
      %v729 = vpop.f32.mrf.mxu0
      %v730 = vadd.f32 %v255, %v729
      %v731 = vpop.f32.mrf.mxu0
      %732 = vmatprep.mubr.f32.mxu0 0.0
      %733 = vmatmul.mubr.f32.gmra.mxu0 %v373
      %v734 = vpop.f32.mrf.mxu0
      %v735 = vadd.f32 %v255, %v734
      %v736 = vpop.f32.mrf.mxu0
      %737 = vmatprep.mubr.f32.mxu0 0.0
      %738 = vmatmul.mubr.f32.gmra.mxu0 %v376
      %v739 = vpop.f32.mrf.mxu0
      %v740 = vadd.f32 %v255, %v739
      %v741 = vpop.f32.mrf.mxu0
      %742 = vmatprep.mubr.f32.mxu0 0.0
      %743 = vmatmul.mubr.f32.gmra.mxu0 %v379
      %v744 = vpop.f32.mrf.mxu0
      %v745 = vadd.f32 %v255, %v744
      %v746 = vpop.f32.mrf.mxu0
      %747 = vmatprep.mubr.f32.mxu0 0.0
      %748 = vmatmul.mubr.f32.gmra.mxu0 %v382
      %v749 = vpop.f32.mrf.mxu0
      %v750 = vadd.f32 %v255, %v749
      %v751 = vpop.f32.mrf.mxu0
      %752 = vmatprep.mubr.f32.mxu0 0.0
      %753 = vmatmul.mubr.f32.gmra.mxu0 %v385
      %v754 = vpop.f32.mrf.mxu0
      %v755 = vadd.f32 %v255, %v754
      %v756 = vpop.f32.mrf.mxu0
      %757 = vmatprep.mubr.f32.mxu0 0.0
      %758 = vmatmul.mubr.f32.gmra.mxu0 %v388
      %v759 = vpop.f32.mrf.mxu0
      %v760 = vadd.f32 %v255, %v759
      %v761 = vpop.f32.mrf.mxu0
      %762 = vmatprep.mubr.f32.mxu0 0.0
      %763 = vmatmul.mubr.f32.gmra.mxu0 %v391
      %v764 = vpop.f32.mrf.mxu0
      %v765 = vadd.f32 %v255, %v764
      %v766 = vpop.f32.mrf.mxu0
      %767 = vmatprep.mubr.f32.mxu0 0.0
      %768 = vmatmul.mubr.f32.gmra.mxu0 %v394
      %v769 = vpop.f32.mrf.mxu0
      %v770 = vadd.f32 %v255, %v769
      %v771 = vpop.f32.mrf.mxu0
      %772 = vmatprep.mubr.f32.mxu0 0.0
      %773 = vmatmul.mubr.f32.gmra.mxu0 %v397
      %v774 = vpop.f32.mrf.mxu0
      %v775 = vadd.f32 %v255, %v774
      %v776 = vpop.f32.mrf.mxu0
      %777 = vmatprep.mubr.f32.mxu0 0.0
      %778 = vmatmul.mubr.f32.gmra.mxu0 %v400
      %v779 = vpop.f32.mrf.mxu0
      %v780 = vadd.f32 %v255, %v779
      %v781 = vpop.f32.mrf.mxu0
      %782 = vmatprep.mubr.f32.mxu0 0.0
      %783 = vmatmul.mubr.f32.gmra.mxu0 %v403
      %v784 = vpop.f32.mrf.mxu0
      %v785 = vadd.f32 %v255, %v784
      %v786 = vpop.f32.mrf.mxu0
      %787 = vmatprep.mubr.f32.mxu0 0.0
      %788 = vmatmul.mubr.f32.gmra.mxu0 %v406
      %v789 = vpop.f32.mrf.mxu0
      %v790 = vadd.f32 %v255, %v789
      %v791 = vpop.f32.mrf.mxu0
      %792 = vmatprep.mubr.f32.mxu0 0.0
      %793 = vmatmul.mubr.f32.gmra.mxu0 %v409
      %v794 = vpop.f32.mrf.mxu0
      %v795 = vadd.f32 %v255, %v794
      %v796 = vpop.f32.mrf.mxu0
      %797 = vmatprep.mubr.f32.mxu0 0.0
      %798 = vmatmul.mubr.f32.gmra.mxu0 %v412
      %v799 = vpop.f32.mrf.mxu0
      %v800 = vadd.f32 %v255, %v799
      %v801 = vpop.f32.mrf.mxu0
      %802 = vmatprep.mubr.f32.mxu0 0.0
      %803 = vmatmul.mubr.f32.gmra.mxu0 %v415
      %v804 = vpop.f32.mrf.mxu0
      %v805 = vadd.f32 %v255, %v804
      %v806 = vpop.f32.mrf.mxu0
      %807 = vmatprep.mubr.f32.mxu0 0.0
      %808 = vmatmul.mubr.f32.gmra.mxu0 %v418
      %v809 = vpop.f32.mrf.mxu0
      %v810 = vadd.f32 %v255, %v809
      %v811 = vpop.f32.mrf.mxu0
      %812 = vmatprep.mubr.f32.mxu0 0.0
      %813 = vmatmul.mubr.f32.gmra.mxu0 %v421
      %v814 = vpop.f32.mrf.mxu0
      %v815 = vadd.f32 %v255, %v814
      %v816 = vpop.f32.mrf.mxu0
      %817 = vmatprep.mubr.f32.mxu0 0.0
      %818 = vmatmul.mubr.f32.gmra.mxu0 %v424
      %v819 = vpop.f32.mrf.mxu0
      %v820 = vadd.f32 %v255, %v819
      %v821 = vpop.f32.mrf.mxu0
      %822 = vmatprep.mubr.f32.mxu0 0.0
      %823 = vmatmul.mubr.f32.gmra.mxu0 %v427
      %v824 = vpop.f32.mrf.mxu0
      %v825 = vadd.f32 %v255, %v824
      %v826 = vpop.f32.mrf.mxu0
      %827 = vmatprep.mubr.f32.mxu0 0.0
      %828 = vmatmul.mubr.f32.gmra.mxu0 %v430
      %v829 = vpop.f32.mrf.mxu0
      %v830 = vadd.f32 %v255, %v829
      %v831 = vpop.f32.mrf.mxu0
      %832 = vmatprep.mubr.f32.mxu0 0.0
      %833 = vmatmul.mubr.f32.gmra.mxu0 %v433
      %v834 = vpop.f32.mrf.mxu0
      %v835 = vadd.f32 %v255, %v834
      %v836 = vpop.f32.mrf.mxu0
      %837 = vmatprep.mubr.f32.mxu0 0.0
      %838 = vmatmul.mubr.f32.gmra.mxu0 %v436
      %v839 = vpop.f32.mrf.mxu0
      %v840 = vadd.f32 %v255, %v839
      %v841 = vpop.f32.mrf.mxu0
      %842 = vmatprep.mubr.f32.mxu0 0.0
      %843 = vmatmul.mubr.f32.gmra.mxu0 %v439
      %v844 = vpop.f32.mrf.mxu0
      %v845 = vadd.f32 %v255, %v844
      %v846 = vpop.f32.mrf.mxu0
      %847 = vmatprep.mubr.f32.mxu0 0.0
      %848 = vmatmul.mubr.f32.gmra.mxu0 %v442
      %v849 = vpop.f32.mrf.mxu0
      %v850 = vadd.f32 %v255, %v849
      %v851 = vpop.f32.mrf.mxu0
      %852 = vmatprep.mubr.f32.mxu0 0.0
      %853 = vmatmul.mubr.f32.gmra.mxu0 %v445
      %v854 = vpop.f32.mrf.mxu0
      %v855 = vadd.f32 %v255, %v854
      %v856 = vpop.f32.mrf.mxu0
      %857 = vmatprep.mubr.f32.mxu0 0.0
      %858 = vmatmul.mubr.f32.gmra.mxu0 %v448
      %v859 = vpop.f32.mrf.mxu0
      %v860 = vadd.f32 %v255, %v859
      %v861 = vpop.f32.mrf.mxu0
      %862 = vmatprep.mubr.f32.mxu0 0.0
      %863 = vmatmul.mubr.f32.gmra.mxu0 %v451
      %v864 = vpop.f32.mrf.mxu0
      %v865 = vadd.f32 %v255, %v864
      %v866 = vpop.f32.mrf.mxu0
      %867 = vmatprep.mubr.f32.mxu0 0.0
      %868 = vmatmul.mubr.f32.gmra.mxu0 %v454
      %v869 = vpop.f32.mrf.mxu0
      %v870 = vadd.f32 %v255, %v869
      %v871 = vpop.f32.mrf.mxu0
      %872 = vmatprep.mubr.f32.mxu0 0.0
      %873 = vmatmul.mubr.f32.gmra.mxu0 %v457
      %v874 = vpop.f32.mrf.mxu0
      %v875 = vadd.f32 %v255, %v874
      %v876 = vpop.f32.mrf.mxu0
      %877 = vmatprep.mubr.f32.mxu0 0.0
      %878 = vmatmul.mubr.f32.gmra.mxu0 %v460
      %v879 = vpop.f32.mrf.mxu0
      %v880 = vadd.f32 %v255, %v879
      %v881 = vpop.f32.mrf.mxu0
      %882 = vmatprep.mubr.f32.mxu0 0.0
      %883 = vmatmul.mubr.f32.gmra.mxu0 %v463
      %v884 = vpop.f32.mrf.mxu0
      %v885 = vadd.f32 %v255, %v884
      %v886 = vpop.f32.mrf.mxu0
      %887 = vmatprep.mubr.f32.mxu0 0.0
      %888 = vmatmul.mubr.f32.gmra.mxu0 %v466
      %v889 = vpop.f32.mrf.mxu0
      %v890 = vadd.f32 %v255, %v889
      %v891 = vpop.f32.mrf.mxu0
      %892 = vmatprep.mubr.f32.mxu0 0.0
      %893 = vmatmul.mubr.f32.gmra.mxu0 %v469
      %v894 = vpop.f32.mrf.mxu0
      %v895 = vadd.f32 %v255, %v894
      %v896 = vpop.f32.mrf.mxu0
      %897 = vmatprep.mubr.f32.mxu0 0.0
      %898 = vmatmul.mubr.f32.gmra.mxu0 %v472
      %v899 = vpop.f32.mrf.mxu0
      %v900 = vadd.f32 %v255, %v899
      %v901 = vpop.f32.mrf.mxu0
      %902 = vdwg.mxu0
      %v903 = vmax.f32 %v545, %v635
      %v904 = vmax.f32 %v550, %v640
      %v905 = vmax.f32 %v555, %v645
      %v906 = vmax.f32 %v560, %v650
      %v907 = vmax.f32 %v565, %v655
      %v908 = vmax.f32 %v570, %v660
      %v909 = vmax.f32 %v575, %v665
      %v910 = vmax.f32 %v580, %v670
      %v911 = vmax.f32 %v585, %v675
      %v912 = vmax.f32 %v590, %v680
      %v913 = vmax.f32 %v595, %v685
      %v914 = vmax.f32 %v600, %v690
      %v915 = vmax.f32 %v605, %v695
      %v916 = vmax.f32 %v610, %v700
      %v917 = vmax.f32 %v615, %v705
      %v918 = vmax.f32 %v620, %v710
      %v919 = vmax.f32 %v625, %v715
      %v920 = vmax.f32 %v630, %v720
      %v921 = vmax.f32 %v725, %v815
      %v922 = vmax.f32 %v730, %v820
      %v923 = vmax.f32 %v735, %v825
      %v924 = vmax.f32 %v740, %v830
      %v925 = vmax.f32 %v745, %v835
      %v926 = vmax.f32 %v750, %v840
      %v927 = vmax.f32 %v755, %v845
      %v928 = vmax.f32 %v760, %v850
      %v929 = vmax.f32 %v765, %v855
      %v930 = vmax.f32 %v770, %v860
      %v931 = vmax.f32 %v775, %v865
      %v932 = vmax.f32 %v780, %v870
      %v933 = vmax.f32 %v785, %v875
      %v934 = vmax.f32 %v790, %v880
      %v935 = vmax.f32 %v795, %v885
      %v936 = vmax.f32 %v800, %v890
      %v937 = vmax.f32 %v805, %v895
      %v938 = vmax.f32 %v810, %v900
      %v939 = vmax.f32 %v903, %v921
      %v940 = vmax.f32 %v904, %v922
      %v941 = vmax.f32 %v905, %v923
      %v942 = vmax.f32 %v906, %v924
      %v943 = vmax.f32 %v907, %v925
      %v944 = vmax.f32 %v908, %v926
      %v945 = vmax.f32 %v909, %v927
      %v946 = vmax.f32 %v910, %v928
      %v947 = vmax.f32 %v911, %v929
      %v948 = vmax.f32 %v912, %v930
      %v949 = vmax.f32 %v913, %v931
      %v950 = vmax.f32 %v914, %v932
      %v951 = vmax.f32 %v915, %v933
      %v952 = vmax.f32 %v916, %v934
      %v953 = vmax.f32 %v917, %v935
      %v954 = vmax.f32 %v918, %v936
      %v955 = vmax.f32 %v919, %v937
      %v956 = vmax.f32 %v920, %v938
      %v957 = vmax.f32 %v939, 0.0
      %v958 = vmax.f32 %v940, 0.0
      %v959 = vmax.f32 %v941, 0.0
      %v960 = vmax.f32 %v942, 0.0
      %v961 = vmax.f32 %v943, 0.0
      %v962 = vmax.f32 %v944, 0.0
      %v963 = vmax.f32 %v945, 0.0
      %v964 = vmax.f32 %v946, 0.0
      %v965 = vmax.f32 %v947, 0.0
      %v966 = vmax.f32 %v948, 0.0
      %v967 = vmax.f32 %v949, 0.0
      %v968 = vmax.f32 %v950, 0.0
      %v969 = vmax.f32 %v951, 0.0
      %v970 = vmax.f32 %v952, 0.0
      %v971 = vmax.f32 %v953, 0.0
      %v972 = vmax.f32 %v954, 0.0
      %v973 = vmax.f32 %v955, 0.0
      %v974 = vmax.f32 %v956, 0.0
      %975 = vst [vmem:[%s172] sm:$0xff] %v957
      %976 = vst [vmem:[%s172 + $0x8] sm:$0xff] %v958
      %977 = vst [vmem:[%s172 + $0x10] sm:$0xff] %v959
      %978 = vst [vmem:[%s172 + $0x18] sm:$0xff] %v960
      %979 = vst [vmem:[%s172 + $0x20] sm:$0xff] %v961
      %980 = vst [vmem:[%s172 + $0x28] sm:$0xff] %v962
      %981 = vst [vmem:[%s172 + $0x30] sm:$0xff] %v963
      %982 = vst [vmem:[%s172 + $0x38] sm:$0xff] %v964
      %983 = vst [vmem:[%s172 + $0x40] sm:$0xff] %v965
      %984 = vst [vmem:[%s172 + $0x48] sm:$0xff] %v966
      %985 = vst [vmem:[%s172 + $0x50] sm:$0xff] %v967
      %986 = vst [vmem:[%s172 + $0x58] sm:$0xff] %v968
      %987 = vst [vmem:[%s172 + $0x60] sm:$0xff] %v969
      %988 = vst [vmem:[%s172 + $0x68] sm:$0xff] %v970
      %989 = vst [vmem:[%s172 + $0x70] sm:$0xff] %v971
      %990 = vst [vmem:[%s172 + $0x78] sm:$0xff] %v972
      %991 = vst [vmem:[%s172 + $0x80] sm:$0xff] %v973
      %992 = vst [vmem:[%s172 + $0x88] sm:$0xff] %v974
      %s993 = smul.u32 18, %s14
      %p994 = scmp.lt.s32.totalorder %s993, 35
      %s995 = scalar_select %p994, %s993, 35
      %s996 = smul.addr %s995, 8
      %s997 = scalar_lea.vmem %s3, %s996
      // Predicated region
      $region33: #{net_forward.3} parent=31 // pred_check
        %p998 = pneg %p100
      $region34: #{net_forward.3} parent=31 // pred_check_branch
        %1000 = sbr.rel (%p998) target = $region36
      $region35: #{net_forward.3} parent=31 // pred_region
        %s1001 = smul.u32 18, %s14
      $region36: #{net_forward.3} parent=31 // pred_fallthru
        _
    $region32: #{net_forward.3} parent=5 // pred_fallthru
      _
    %p1002 = scmp.le.s32.totalorder 2, %s9
    // Predicated region
    $region37: #{net_forward.3} parent=5 // pred_check
      %p1003 = pneg %p1002
    $region38: #{net_forward.3} parent=5 // pred_check_branch
      %1005 = sbr.rel (%p1003) target = $region40
    $region39: #{net_forward.3} parent=5 // pred_region
      %s1006 = ssub.s32 %s9, 2
      // Predicated region
      $region41: #{net_forward.3} parent=39 // pred_check
        %p1007 = pneg %p106
      $region42: #{net_forward.3} parent=39 // pred_check_branch
        %1009 = sbr.rel (%p1007) target = $region44
      $region43: #{net_forward.3} parent=39 // pred_region
        %s1010 = smul.u32 18, %s15
        %p1011 = scmp.lt.s32.totalorder %s1010, 35
        %s1012 = scalar_select %p1011, %s1010, 35
        %s1013 = smul.addr %s1012, 8
        %s1014 = scalar_lea.vmem %s3, %s1013
      $region44: #{net_forward.3} parent=39 // pred_fallthru
        _
    $region40: #{net_forward.3} parent=5 // pred_fallthru
      _
  $region6: #{net_forward.3} parent=0 // loop_footer
    %s13 = sadd.s32 1, %s9
  $region7: #{net_forward.3} parent=0 // loop_footer_branch
    %8 = sbr.rel target = $region3
  $region8: #{net_forward.3} parent=0 // loop_exit
    _

// kernel: net_forward.4
$region0: #{net_forward.4}
  #allocation0 [shape = 'u32[]', space=smem, size = 0x4, offset = 0x4, fixed_abs, tag = 'smem constant byte address 0x4 - core index']
  #allocation1 [shape = 'u32[144,128]{1,0:T(1,128)}', space=vmem, size = 0x12000, scoped, tag = 'internal scratch']
  %s0 = inlined_call_operand.vmem [shape: f32[128,250], index: 0, kind: input, shape index: {}]
  %s1 = inlined_call_operand.vmem [shape: f32[250,128], index: 1, kind: input, shape index: {}]
  %s2 = inlined_call_operand.vmem [shape: f32[1,128], index: 2, kind: input, shape index: {}]
  %s3 = inlined_call_operand.vmem [shape: f32[32,128], index: 3, kind: output, shape index: {}]
  %s4 = sld [smem:[#allocation0]]
  $region45: #{net_forward.4} parent=0
    _
  %s6 = ssub.s32 1, %s4
  %s7 = scalar_select 0, %s6, %s4
  loop: start=0, step=1, limit=4
  $region2: #{net_forward.4} parent=0 // loop_pre_header
    _
  $region3: #{net_forward.4} parent=0 // loop_header
    %s9 = sphi 0, %s13
    %p10 = scmp.ge.s32.totalorder %s9, 4
    %s19 = sphi 0, %s21
    %s22 = sphi 0, %s19
    %s23 = sphi 0, %s22
    %s39 = sphi 0, %s23
    %s43 = sphi 0, %s43
    %s45 = sphi 0, %s43
    %s46 = sphi 0, %s45
    %s60 = sphi 0, %s46
    %s64 = sphi 0, %s64
    %s66 = sphi 0, %s64
    %s67 = sphi 0, %s66
    %s81 = sphi 0, %s67
    %s87 = sphi 0, %s89
    %s90 = sphi 0, %s87
    %s91 = sphi 0, %s90
    %s107 = sphi 0, %s91
  $region4: #{net_forward.4} parent=0 // loop_header_branch
    %12 = sbr.rel (%p10) target = $region8
  $region5: #{net_forward.4} parent=0 // loop_body
    %s14 = ssub.s32 %s9, 1
    %s15 = ssub.s32 %s9, 2
    %s16 = sadd.s32 %s9, 1
    %s17 = ssub.s32 %s9, %s16
    %p18 = scmp.eq.s32.totalorder %s17, 0
    %s20 = sadd.s32 %s19, 1
    %s21 = scalar_select %p18, %s19, %s20
    %p24 = pneg %p18
    %p25 = scmp.eq.s32.totalorder %s9, 1
    %p26 = por %p24, %p25
    %p27 = scmp.ne.s32.totalorder %s19, %s22
    %p28 = scmp.eq.s32.totalorder %s9, 0
    %p29 = por %p27, %p28
    %p30 = scmp.ne.s32.totalorder %s19, %s22
    %p31 = scmp.eq.s32.totalorder %s14, 1
    %p32 = por %p30, %p31
    %p33 = scmp.ne.s32.totalorder %s22, %s23
    %p34 = scmp.eq.s32.totalorder %s14, 0
    %p35 = por %p33, %p34
    %p36 = scmp.ne.s32.totalorder %s22, %s23
    %p37 = scmp.eq.s32.totalorder %s15, 1
    %p38 = por %p36, %p37
    %p40 = scmp.ne.s32.totalorder %s23, %s39
    %p41 = scmp.eq.s32.totalorder %s15, 0
    %p42 = por %p40, %p41
    %s44 = sadd.s32 %s43, 1
    %p47 = scmp.eq.s32.totalorder %s9, 1
    %p48 = scmp.ne.s32.totalorder %s43, %s45
    %p49 = scmp.eq.s32.totalorder %s9, 0
    %p50 = por %p48, %p49
    %p51 = scmp.ne.s32.totalorder %s43, %s45
    %p52 = scmp.eq.s32.totalorder %s14, 1
    %p53 = por %p51, %p52
    %p54 = scmp.ne.s32.totalorder %s45, %s46
    %p55 = scmp.eq.s32.totalorder %s14, 0
    %p56 = por %p54, %p55
    %p57 = scmp.ne.s32.totalorder %s45, %s46
    %p58 = scmp.eq.s32.totalorder %s15, 1
    %p59 = por %p57, %p58
    %p61 = scmp.ne.s32.totalorder %s46, %s60
    %p62 = scmp.eq.s32.totalorder %s15, 0
    %p63 = por %p61, %p62
    %s65 = sadd.s32 %s64, 1
    %p68 = scmp.eq.s32.totalorder %s9, 1
    %p69 = scmp.ne.s32.totalorder %s64, %s66
    %p70 = scmp.eq.s32.totalorder %s9, 0
    %p71 = por %p69, %p70
    %p72 = scmp.ne.s32.totalorder %s64, %s66
    %p73 = scmp.eq.s32.totalorder %s14, 1
    %p74 = por %p72, %p73
    %p75 = scmp.ne.s32.totalorder %s66, %s67
    %p76 = scmp.eq.s32.totalorder %s14, 0
    %p77 = por %p75, %p76
    %p78 = scmp.ne.s32.totalorder %s66, %s67
    %p79 = scmp.eq.s32.totalorder %s15, 1
    %p80 = por %p78, %p79
    %p82 = scmp.ne.s32.totalorder %s67, %s81
    %p83 = scmp.eq.s32.totalorder %s15, 0
    %p84 = por %p82, %p83
    %s85 = ssub.s32 %s9, %s16
    %p86 = scmp.eq.s32.totalorder %s85, 0
    %s88 = sadd.s32 %s87, 1
    %s89 = scalar_select %p86, %s87, %s88
    %p92 = pneg %p86
    %p93 = scmp.eq.s32.totalorder %s9, 1
    %p94 = por %p92, %p93
    %p95 = scmp.ne.s32.totalorder %s87, %s90
    %p96 = scmp.eq.s32.totalorder %s9, 0
    %p97 = por %p95, %p96
    %p98 = scmp.ne.s32.totalorder %s87, %s90
    %p99 = scmp.eq.s32.totalorder %s14, 1
    %p100 = por %p98, %p99
    %p101 = scmp.ne.s32.totalorder %s90, %s91
    %p102 = scmp.eq.s32.totalorder %s14, 0
    %p103 = por %p101, %p102
    %p104 = scmp.ne.s32.totalorder %s90, %s91
    %p105 = scmp.eq.s32.totalorder %s15, 1
    %p106 = por %p104, %p105
    %p108 = scmp.ne.s32.totalorder %s91, %s107
    %p109 = scmp.eq.s32.totalorder %s15, 0
    %p110 = por %p108, %p109
    %p111 = scmp.le.s32.totalorder 1, %s9
    %p112 = scmp.lt.s32.totalorder %s9, 3
    %p113 = pnand %p111, %p112
    %p114 = pneg %p113
    // Predicated region
    $region9: #{net_forward.4} parent=5 // pred_check
      _
    $region10: #{net_forward.4} parent=5 // pred_check_branch
      %116 = sbr.rel (%p113) target = $region12
    $region11: #{net_forward.4} parent=5 // pred_region
      %s117 = ssub.s32 %s9, 1
      // Predicated region
      $region13: #{net_forward.4} parent=11 // pred_check
        %p118 = pneg %p56
      $region14: #{net_forward.4} parent=11 // pred_check_branch
        %120 = sbr.rel (%p118) target = $region16
      $region15: #{net_forward.4} parent=11 // pred_region
        _
      $region16: #{net_forward.4} parent=11 // pred_fallthru
        _
      // Predicated region
      $region17: #{net_forward.4} parent=11 // pred_check
        %p121 = pneg %p77
      $region18: #{net_forward.4} parent=11 // pred_check_branch
        %123 = sbr.rel (%p121) target = $region20
      $region19: #{net_forward.4} parent=11 // pred_region
        _
      $region20: #{net_forward.4} parent=11 // pred_fallthru
        _
    $region12: #{net_forward.4} parent=5 // pred_fallthru
      _
    %p124 = scmp.lt.s32.totalorder %s9, 2
    // Predicated region
    $region21: #{net_forward.4} parent=5 // pred_check
      %p125 = pneg %p124
    $region22: #{net_forward.4} parent=5 // pred_check_branch
      %127 = sbr.rel (%p125) target = $region24
    $region23: #{net_forward.4} parent=5 // pred_region
      // Predicated region
      $region25: #{net_forward.4} parent=23 // pred_check
        %p128 = pneg %p29
      $region26: #{net_forward.4} parent=23 // pred_check_branch
        %130 = sbr.rel (%p128) target = $region28
      $region27: #{net_forward.4} parent=23 // pred_region
        %s131 = smul.u32 8, %s9
        %p132 = scmp.lt.s32.totalorder %s131, 15
        %s133 = scalar_select %p132, %s131, 15
        %s134 = smul.addr %s133, 2
        %s135 = smul.addr %s134, 8
        %s136 = scalar_lea.vmem %s0, %s135
        %s137 = smul.u32 8, %s9
      $region28: #{net_forward.4} parent=23 // pred_fallthru
        _
    $region24: #{net_forward.4} parent=5 // pred_fallthru
      _
    %p138 = scmp.le.s32.totalorder 1, %s9
    %p139 = scmp.lt.s32.totalorder %s9, 3
    %p140 = pnand %p138, %p139
    %p141 = pneg %p140
    // Predicated region
    $region29: #{net_forward.4} parent=5 // pred_check
      _
    $region30: #{net_forward.4} parent=5 // pred_check_branch
      %143 = sbr.rel (%p140) target = $region32
    $region31: #{net_forward.4} parent=5 // pred_region
      %s144 = ssub.s32 %s9, 1
      %s145 = smul.u32 8, %s14
      %p146 = scmp.lt.s32.totalorder %s145, 15
      %s147 = scalar_select %p146, %s145, 15
      %s148 = smul.addr %s147, 2
      %s149 = smul.addr %s148, 8
      %s150 = scalar_lea.vmem %s0, %s149
      %p151 = pneg %p35
      %p152 = pneg %p32
      %p153 = pneg %p56
      %p154 = pneg %p53
      %p155 = pneg %p77
      %p156 = pneg %p74
      %p157 = pneg %p103
      %p158 = pneg %p100
      %s159 = smul.u32 2, %s14
      %p160 = scmp.lt.s32.totalorder %s159, 3
      %s161 = scalar_select %p160, %s159, 3
      %s162 = smul.addr %s161, 8
      %s163 = scalar_lea.vmem %s3, %s162
      %s164 = smul.u32 8, %s14
      %p165 = scmp.lt.s32.totalorder %s164, 15
      %s166 = scalar_select %p165, %s164, 15
      %s167 = smul.addr %s166, 2
      %s168 = smul.addr %s167, 8
      %s169 = scalar_lea.vmem %s0, %s168
      %s170 = smul.u32 8, %s14
      %s171 = smul.u32 2, %s14
      %p172 = scmp.lt.s32.totalorder %s171, 3
      %s173 = scalar_select %p172, %s171, 3
      %s174 = smul.addr %s173, 8
      %s175 = scalar_lea.vmem %s3, %s174
      %s176 = smul.u32 2, %s14
      %v177 = vld [vmem:[%s169] sm:$0xff]
      %v178 = vld [vmem:[%s169 + $0x8] sm:$0xff]
      %v179 = vld [vmem:[%s169 + $0x10] sm:$0xff]
      %v180 = vld [vmem:[%s169 + $0x18] sm:$0xff]
      %v181 = vld [vmem:[%s169 + $0x20] sm:$0xff]
      %v182 = vld [vmem:[%s169 + $0x28] sm:$0xff]
      %v183 = vld [vmem:[%s169 + $0x30] sm:$0xff]
      %v184 = vld [vmem:[%s169 + $0x38] sm:$0xff]
      %v185 = vld [vmem:[%s169 + $0x40] sm:$0xff]
      %v186 = vld [vmem:[%s169 + $0x48] sm:$0xff]
      %v187 = vld [vmem:[%s169 + $0x50] sm:$0xff]
      %v188 = vld [vmem:[%s169 + $0x58] sm:$0xff]
      %v189 = vld [vmem:[%s169 + $0x60] sm:$0xff]
      %v190 = vld [vmem:[%s169 + $0x68] sm:$0xff]
      %v191 = vld [vmem:[%s169 + $0x70] sm:$0xff]
      %v192 = vld [vmem:[%s169 + $0x78] sm:$0xff]
      %v193 = vld [vmem:[%s1] sm:$0xff]
      %v194 = vld [vmem:[%s1 + $0x8] sm:$0xff]
      %v195 = vld [vmem:[%s1 + $0x10] sm:$0xff]
      %v196 = vld [vmem:[%s1 + $0x18] sm:$0xff]
      %v197 = vld [vmem:[%s1 + $0x20] sm:$0xff]
      %v198 = vld [vmem:[%s1 + $0x28] sm:$0xff]
      %v199 = vld [vmem:[%s1 + $0x30] sm:$0xff]
      %v200 = vld [vmem:[%s1 + $0x38] sm:$0xff]
      %v201 = vld [vmem:[%s1 + $0x40] sm:$0xff]
      %v202 = vld [vmem:[%s1 + $0x48] sm:$0xff]
      %v203 = vld [vmem:[%s1 + $0x50] sm:$0xff]
      %v204 = vld [vmem:[%s1 + $0x58] sm:$0xff]
      %v205 = vld [vmem:[%s1 + $0x60] sm:$0xff]
      %v206 = vld [vmem:[%s1 + $0x68] sm:$0xff]
      %v207 = vld [vmem:[%s1 + $0x70] sm:$0xff]
      %v208 = vld [vmem:[%s1 + $0x78] sm:$0xff]
      %v209 = vld [vmem:[%s1 + $0x80] sm:$0xff]
      %v210 = vld [vmem:[%s1 + $0x88] sm:$0xff]
      %v211 = vld [vmem:[%s1 + $0x90] sm:$0xff]
      %v212 = vld [vmem:[%s1 + $0x98] sm:$0xff]
      %v213 = vld [vmem:[%s1 + $0xa0] sm:$0xff]
      %v214 = vld [vmem:[%s1 + $0xa8] sm:$0xff]
      %v215 = vld [vmem:[%s1 + $0xb0] sm:$0xff]
      %v216 = vld [vmem:[%s1 + $0xb8] sm:$0xff]
      %v217 = vld [vmem:[%s1 + $0xc0] sm:$0xff]
      %v218 = vld [vmem:[%s1 + $0xc8] sm:$0xff]
      %v219 = vld [vmem:[%s1 + $0xd0] sm:$0xff]
      %v220 = vld [vmem:[%s1 + $0xd8] sm:$0xff]
      %v221 = vld [vmem:[%s1 + $0xe0] sm:$0xff]
      %v222 = vld [vmem:[%s1 + $0xe8] sm:$0xff]
      %v223 = vld [vmem:[%s1 + $0xf0] sm:$0xff]
      %v224 = vld [vmem:[%s1 + $0xf8] sm:$0x3]
      %v225 = vld [vmem:[%s2] sm:$0x1]
      %v227 = vlaneseq
      %v228 = vshrl.u32 %v227, 7
      %v229 = vsub.s32 0, %v228
      %v230 = vrot.slane %v225, %v229
      %vm232 = vcmask 998400
      %v234 = vsel %vm232, %v178, 0
      %v237 = vsel %vm232, %v180, 0
      %v240 = vsel %vm232, %v182, 0
      %v243 = vsel %vm232, %v184, 0
      %v246 = vsel %vm232, %v186, 0
      %v249 = vsel %vm232, %v188, 0
      %v252 = vsel %vm232, %v190, 0
      %v255 = vsel %vm232, %v192, 0
      %vm257 = vcmask 1041408
      %v259 = vsel %vm257, %v224, 0
      %261 = vmatprep.subr.mxu0 0.0
      %262 = vmatpush1.msra.mxu0 %v208
      %263 = vmatprep.subr.mxu0 0.0
      %264 = vmatpush1.msra.mxu0 %v207
      %265 = vmatprep.subr.mxu0 0.0
      %266 = vmatpush1.msra.mxu0 %v206
      %267 = vmatprep.subr.mxu0 0.0
      %268 = vmatpush1.msra.mxu0 %v205
      %269 = vmatprep.subr.mxu0 0.0
      %270 = vmatpush1.msra.mxu0 %v204
      %271 = vmatprep.subr.mxu0 0.0
      %272 = vmatpush1.msra.mxu0 %v203
      %273 = vmatprep.subr.mxu0 0.0
      %274 = vmatpush1.msra.mxu0 %v202
      %275 = vmatprep.subr.mxu0 0.0
      %276 = vmatpush1.msra.mxu0 %v201
      %277 = vmatprep.subr.mxu0 0.0
      %278 = vmatpush1.msra.mxu0 %v200
      %279 = vmatprep.subr.mxu0 0.0
      %280 = vmatpush1.msra.mxu0 %v199
      %281 = vmatprep.subr.mxu0 0.0
      %282 = vmatpush1.msra.mxu0 %v198
      %283 = vmatprep.subr.mxu0 0.0
      %284 = vmatpush1.msra.mxu0 %v197
      %285 = vmatprep.subr.mxu0 0.0
      %286 = vmatpush1.msra.mxu0 %v196
      %287 = vmatprep.subr.mxu0 0.0
      %288 = vmatpush1.msra.mxu0 %v195
      %289 = vmatprep.subr.mxu0 0.0
      %290 = vmatpush1.msra.mxu0 %v194
      %291 = vmatprep.subr.mxu0 0.0
      %292 = vmatpush1.msra.mxu0 %v193
      %293 = vmatprep.subr.mxu0 0.0
      %294 = vmatpush2.msra.mxu0 %v259
      %295 = vmatprep.subr.mxu0 0.0
      %296 = vmatpush2.msra.mxu0 %v223
      %297 = vmatprep.subr.mxu0 0.0
      %298 = vmatpush2.msra.mxu0 %v222
      %299 = vmatprep.subr.mxu0 0.0
      %300 = vmatpush2.msra.mxu0 %v221
      %301 = vmatprep.subr.mxu0 0.0
      %302 = vmatpush2.msra.mxu0 %v220
      %303 = vmatprep.subr.mxu0 0.0
      %304 = vmatpush2.msra.mxu0 %v219
      %305 = vmatprep.subr.mxu0 0.0
      %306 = vmatpush2.msra.mxu0 %v218
      %307 = vmatprep.subr.mxu0 0.0
      %308 = vmatpush2.msra.mxu0 %v217
      %309 = vmatprep.subr.mxu0 0.0
      %310 = vmatpush2.msra.mxu0 %v216
      %311 = vmatprep.subr.mxu0 0.0
      %312 = vmatpush2.msra.mxu0 %v215
      %313 = vmatprep.subr.mxu0 0.0
      %314 = vmatpush2.msra.mxu0 %v214
      %315 = vmatprep.subr.mxu0 0.0
      %316 = vmatpush2.msra.mxu0 %v213
      %317 = vmatprep.subr.mxu0 0.0
      %318 = vmatpush2.msra.mxu0 %v212
      %319 = vmatprep.subr.mxu0 0.0
      %320 = vmatpush2.msra.mxu0 %v211
      %321 = vmatprep.subr.mxu0 0.0
      %322 = vmatpush2.msra.mxu0 %v210
      %323 = vmatprep.subr.mxu0 0.0
      %324 = vmatpush2.msra.mxu0 %v209
      %325 = vmatprep.mubr.f32.mxu0 %v234
      %326 = vmatmul.mubr.f32.gmra.mxu0 %v177
      %v327 = vpop.f32.mrf.mxu0
      %v328 = vadd.f32 %v230, %v327
      %v329 = vpop.f32.mrf.mxu0
      %330 = vmatprep.mubr.f32.mxu0 %v237
      %331 = vmatmul.mubr.f32.gmra.mxu0 %v179
      %v332 = vpop.f32.mrf.mxu0
      %v333 = vadd.f32 %v230, %v332
      %v334 = vpop.f32.mrf.mxu0
      %335 = vmatprep.mubr.f32.mxu0 %v240
      %336 = vmatmul.mubr.f32.gmra.mxu0 %v181
      %v337 = vpop.f32.mrf.mxu0
      %v338 = vadd.f32 %v230, %v337
      %v339 = vpop.f32.mrf.mxu0
      %340 = vmatprep.mubr.f32.mxu0 %v243
      %341 = vmatmul.mubr.f32.gmra.mxu0 %v183
      %v342 = vpop.f32.mrf.mxu0
      %v343 = vadd.f32 %v230, %v342
      %v344 = vpop.f32.mrf.mxu0
      %345 = vmatprep.mubr.f32.mxu0 %v246
      %346 = vmatmul.mubr.f32.gmra.mxu0 %v185
      %v347 = vpop.f32.mrf.mxu0
      %v348 = vadd.f32 %v230, %v347
      %v349 = vpop.f32.mrf.mxu0
      %350 = vmatprep.mubr.f32.mxu0 %v249
      %351 = vmatmul.mubr.f32.gmra.mxu0 %v187
      %v352 = vpop.f32.mrf.mxu0
      %v353 = vadd.f32 %v230, %v352
      %v354 = vpop.f32.mrf.mxu0
      %355 = vmatprep.mubr.f32.mxu0 %v252
      %356 = vmatmul.mubr.f32.gmra.mxu0 %v189
      %v357 = vpop.f32.mrf.mxu0
      %v358 = vadd.f32 %v230, %v357
      %v359 = vpop.f32.mrf.mxu0
      %360 = vmatprep.mubr.f32.mxu0 %v255
      %361 = vmatmul.mubr.f32.gmra.mxu0 %v191
      %v362 = vpop.f32.mrf.mxu0
      %v363 = vadd.f32 %v230, %v362
      %v364 = vpop.f32.mrf.mxu0
      %365 = vdwg.mxu0
      %v366 = vmax.f32 %v328, %v338
      %v367 = vmax.f32 %v333, %v343
      %v368 = vmax.f32 %v348, %v358
      %v369 = vmax.f32 %v353, %v363
      %v370 = vmax.f32 %v366, %v368
      %v371 = vmax.f32 %v367, %v369
      %v372 = vmax.f32 %v370, 0.0
      %v373 = vmax.f32 %v371, 0.0
      %374 = vst [vmem:[%s175] sm:$0xff] %v372
      %375 = vst [vmem:[%s175 + $0x8] sm:$0xff] %v373
      %s376 = smul.u32 2, %s14
      %p377 = scmp.lt.s32.totalorder %s376, 3
      %s378 = scalar_select %p377, %s376, 3
      %s379 = smul.addr %s378, 8
      %s380 = scalar_lea.vmem %s3, %s379
      // Predicated region
      $region33: #{net_forward.4} parent=31 // pred_check
        %p381 = pneg %p100
      $region34: #{net_forward.4} parent=31 // pred_check_branch
        %383 = sbr.rel (%p381) target = $region36
      $region35: #{net_forward.4} parent=31 // pred_region
        %s384 = smul.u32 2, %s14
      $region36: #{net_forward.4} parent=31 // pred_fallthru
        _
    $region32: #{net_forward.4} parent=5 // pred_fallthru
      _
    %p385 = scmp.le.s32.totalorder 2, %s9
    // Predicated region
    $region37: #{net_forward.4} parent=5 // pred_check
      %p386 = pneg %p385
    $region38: #{net_forward.4} parent=5 // pred_check_branch
      %388 = sbr.rel (%p386) target = $region40
    $region39: #{net_forward.4} parent=5 // pred_region
      %s389 = ssub.s32 %s9, 2
      // Predicated region
      $region41: #{net_forward.4} parent=39 // pred_check
        %p390 = pneg %p106
      $region42: #{net_forward.4} parent=39 // pred_check_branch
        %392 = sbr.rel (%p390) target = $region44
      $region43: #{net_forward.4} parent=39 // pred_region
        %s393 = smul.u32 2, %s15
        %p394 = scmp.lt.s32.totalorder %s393, 3
        %s395 = scalar_select %p394, %s393, 3
        %s396 = smul.addr %s395, 8
        %s397 = scalar_lea.vmem %s3, %s396
      $region44: #{net_forward.4} parent=39 // pred_fallthru
        _
    $region40: #{net_forward.4} parent=5 // pred_fallthru
      _
  $region6: #{net_forward.4} parent=0 // loop_footer
    %s13 = sadd.s32 1, %s9
  $region7: #{net_forward.4} parent=0 // loop_footer_branch
    %8 = sbr.rel target = $region3
  $region8: #{net_forward.4} parent=0 // loop_exit
    _

// kernel: net_forward.5
$region0: #{net_forward.5}
  #allocation0 [shape = 'u32[]', space=smem, size = 0x4, offset = 0x4, fixed_abs, tag = 'smem constant byte address 0x4 - core index']
  #allocation1 [shape = 'u32[144,128]{1,0:T(1,128)}', space=vmem, size = 0x12000, scoped, tag = 'internal scratch']
  %s0 = inlined_call_operand.vmem [shape: f32[2,320], index: 0, kind: input, shape index: {}]
  %s1 = inlined_call_operand.vmem [shape: f32[320,128], index: 1, kind: input, shape index: {}]
  %s2 = inlined_call_operand.vmem [shape: f32[1,128], index: 2, kind: input, shape index: {}]
  %s3 = inlined_call_operand.vmem [shape: f32[128,128], index: 3, kind: input, shape index: {}]
  %s4 = inlined_call_operand.vmem [shape: f32[1,128], index: 4, kind: input, shape index: {}]
  %s5 = inlined_call_operand.hbm [shape: f32[2,128], index: 5, kind: output, shape index: {}]
  %s6 = sld [smem:[#allocation0]]
  $region30: #{net_forward.5} parent=0
    _
  %s8 = ssub.s32 1, %s6
  %s9 = scalar_select 0, %s8, %s6
  $region1: #{net_forward.5} parent=0
    #allocation2 [shape = 'u8[1024]{0}', space=vmem, size = 0x400, scoped, tag = 'output window, operand 0, single buffered']
    #allocation3 [shape = 's32[1]{0}', space=sflag, size = 0x4, scoped, tag = 'scoped memory for net_forward.5']
    %10 = vsyncpa [#allocation3], 0
    // Predicated region
    $region2: #{net_forward.5} parent=1 // pred_check
      _
    $region3: #{net_forward.5} parent=1 // pred_check_branch
      %12 = sbr.rel (0) target = $region5
    $region4: #{net_forward.5} parent=1 // pred_region
      _
    $region5: #{net_forward.5} parent=1 // pred_fallthru
      _
    // Predicated region
    $region6: #{net_forward.5} parent=1 // pred_check
      _
    $region7: #{net_forward.5} parent=1 // pred_check_branch
      %14 = sbr.rel (0) target = $region9
    $region8: #{net_forward.5} parent=1 // pred_region
      _
    $region9: #{net_forward.5} parent=1 // pred_fallthru
      _
    // Predicated region
    $region10: #{net_forward.5} parent=1 // pred_check
      _
    $region11: #{net_forward.5} parent=1 // pred_check_branch
      %16 = sbr.rel (0) target = $region13
    $region12: #{net_forward.5} parent=1 // pred_region
      _
    $region13: #{net_forward.5} parent=1 // pred_fallthru
      _
    // Predicated region
    $region14: #{net_forward.5} parent=1 // pred_check
      _
    $region15: #{net_forward.5} parent=1 // pred_check_branch
      %18 = sbr.rel (0) target = $region17
    $region16: #{net_forward.5} parent=1 // pred_region
      _
    $region17: #{net_forward.5} parent=1 // pred_fallthru
      _
    // Predicated region
    $region18: #{net_forward.5} parent=1 // pred_check
      _
    $region19: #{net_forward.5} parent=1 // pred_check_branch
      %20 = sbr.rel (0) target = $region21
    $region20: #{net_forward.5} parent=1 // pred_region
      _
    $region21: #{net_forward.5} parent=1 // pred_fallthru
      _
    %v21 = vld [vmem:[%s0] sm:$0x3f]
    %v22 = vld [vmem:[%s1] sm:$0xff]
    %v23 = vld [vmem:[%s1 + $0x8] sm:$0xff]
    %v24 = vld [vmem:[%s1 + $0x10] sm:$0xff]
    %v25 = vld [vmem:[%s1 + $0x18] sm:$0xff]
    %v26 = vld [vmem:[%s1 + $0x20] sm:$0xff]
    %v27 = vld [vmem:[%s1 + $0x28] sm:$0xff]
    %v28 = vld [vmem:[%s1 + $0x30] sm:$0xff]
    %v29 = vld [vmem:[%s1 + $0x38] sm:$0xff]
    %v30 = vld [vmem:[%s1 + $0x40] sm:$0xff]
    %v31 = vld [vmem:[%s1 + $0x48] sm:$0xff]
    %v32 = vld [vmem:[%s1 + $0x50] sm:$0xff]
    %v33 = vld [vmem:[%s1 + $0x58] sm:$0xff]
    %v34 = vld [vmem:[%s1 + $0x60] sm:$0xff]
    %v35 = vld [vmem:[%s1 + $0x68] sm:$0xff]
    %v36 = vld [vmem:[%s1 + $0x70] sm:$0xff]
    %v37 = vld [vmem:[%s1 + $0x78] sm:$0xff]
    %v38 = vld [vmem:[%s1 + $0x80] sm:$0xff]
    %v39 = vld [vmem:[%s1 + $0x88] sm:$0xff]
    %v40 = vld [vmem:[%s1 + $0x90] sm:$0xff]
    %v41 = vld [vmem:[%s1 + $0x98] sm:$0xff]
    %v42 = vld [vmem:[%s1 + $0xa0] sm:$0xff]
    %v43 = vld [vmem:[%s1 + $0xa8] sm:$0xff]
    %v44 = vld [vmem:[%s1 + $0xb0] sm:$0xff]
    %v45 = vld [vmem:[%s1 + $0xb8] sm:$0xff]
    %v46 = vld [vmem:[%s1 + $0xc0] sm:$0xff]
    %v47 = vld [vmem:[%s1 + $0xc8] sm:$0xff]
    %v48 = vld [vmem:[%s1 + $0xd0] sm:$0xff]
    %v49 = vld [vmem:[%s1 + $0xd8] sm:$0xff]
    %v50 = vld [vmem:[%s1 + $0xe0] sm:$0xff]
    %v51 = vld [vmem:[%s1 + $0xe8] sm:$0xff]
    %v52 = vld [vmem:[%s1 + $0xf0] sm:$0xff]
    %v53 = vld [vmem:[%s1 + $0xf8] sm:$0xff]
    %v54 = vld [vmem:[%s1 + $0x100] sm:$0xff]
    %v55 = vld [vmem:[%s1 + $0x108] sm:$0xff]
    %v56 = vld [vmem:[%s1 + $0x110] sm:$0xff]
    %v57 = vld [vmem:[%s1 + $0x118] sm:$0xff]
    %v58 = vld [vmem:[%s1 + $0x120] sm:$0xff]
    %v59 = vld [vmem:[%s1 + $0x128] sm:$0xff]
    %v60 = vld [vmem:[%s1 + $0x130] sm:$0xff]
    %v61 = vld [vmem:[%s1 + $0x138] sm:$0xff]
    %v62 = vld [vmem:[%s2] sm:$0x1]
    %v64 = vlaneseq
    %v65 = vshrl.u32 %v64, 7
    %v66 = vsub.s32 0, %v65
    %v67 = vrot.slane %v62, %v66
    %v70 = vcombine.high %v21, %v21
    %v72 = vunpack.c.l.s4 1983009808
    %v73 = vunpack.c.0.s8 %v72
    %v74 = vlaneseq
    %v75 = vshrl.u32 %v74, 7
    %v76 = vsub.s32 %v73, %v75
    %v77 = vrot.slane %v21, %v76
    %v79 = vunpack.c.l.s4 1983009808
    %v80 = vunpack.c.0.s8 %v79
    %v81 = vlaneseq
    %v82 = vshrl.u32 %v81, 7
    %v83 = vsub.s32 %v80, %v82
    %v84 = vrot.slane %v70, %v83
    %v85 = vcombine.high %v77, %v77
    %vm88 = vcmask 523264
    %v89 = vsel %vm88, %v84, 0
    %91 = vmatprep.subr.mxu0 0.0
    %92 = vmatpush1.msra.mxu0 %v37
    %93 = vmatprep.subr.mxu0 0.0
    %94 = vmatpush1.msra.mxu0 %v36
    %95 = vmatprep.subr.mxu0 0.0
    %96 = vmatpush1.msra.mxu0 %v35
    %97 = vmatprep.subr.mxu0 0.0
    %98 = vmatpush1.msra.mxu0 %v34
    %99 = vmatprep.subr.mxu0 0.0
    %100 = vmatpush1.msra.mxu0 %v33
    %101 = vmatprep.subr.mxu0 0.0
    %102 = vmatpush1.msra.mxu0 %v32
    %103 = vmatprep.subr.mxu0 0.0
    %104 = vmatpush1.msra.mxu0 %v31
    %105 = vmatprep.subr.mxu0 0.0
    %106 = vmatpush1.msra.mxu0 %v30
    %107 = vmatprep.subr.mxu0 0.0
    %108 = vmatpush1.msra.mxu0 %v29
    %109 = vmatprep.subr.mxu0 0.0
    %110 = vmatpush1.msra.mxu0 %v28
    %111 = vmatprep.subr.mxu0 0.0
    %112 = vmatpush1.msra.mxu0 %v27
    %113 = vmatprep.subr.mxu0 0.0
    %114 = vmatpush1.msra.mxu0 %v26
    %115 = vmatprep.subr.mxu0 0.0
    %116 = vmatpush1.msra.mxu0 %v25
    %117 = vmatprep.subr.mxu0 0.0
    %118 = vmatpush1.msra.mxu0 %v24
    %119 = vmatprep.subr.mxu0 0.0
    %120 = vmatpush1.msra.mxu0 %v23
    %121 = vmatprep.subr.mxu0 0.0
    %122 = vmatpush1.msra.mxu0 %v22
    %123 = vmatprep.subr.mxu0 0.0
    %124 = vmatpush2.msra.mxu0 %v53
    %125 = vmatprep.subr.mxu0 0.0
    %126 = vmatpush2.msra.mxu0 %v52
    %127 = vmatprep.subr.mxu0 0.0
    %128 = vmatpush2.msra.mxu0 %v51
    %129 = vmatprep.subr.mxu0 0.0
    %130 = vmatpush2.msra.mxu0 %v50
    %131 = vmatprep.subr.mxu0 0.0
    %132 = vmatpush2.msra.mxu0 %v49
    %133 = vmatprep.subr.mxu0 0.0
    %134 = vmatpush2.msra.mxu0 %v48
    %135 = vmatprep.subr.mxu0 0.0
    %136 = vmatpush2.msra.mxu0 %v47
    %137 = vmatprep.subr.mxu0 0.0
    %138 = vmatpush2.msra.mxu0 %v46
    %139 = vmatprep.subr.mxu0 0.0
    %140 = vmatpush2.msra.mxu0 %v45
    %141 = vmatprep.subr.mxu0 0.0
    %142 = vmatpush2.msra.mxu0 %v44
    %143 = vmatprep.subr.mxu0 0.0
    %144 = vmatpush2.msra.mxu0 %v43
    %145 = vmatprep.subr.mxu0 0.0
    %146 = vmatpush2.msra.mxu0 %v42
    %147 = vmatprep.subr.mxu0 0.0
    %148 = vmatpush2.msra.mxu0 %v41
    %149 = vmatprep.subr.mxu0 0.0
    %150 = vmatpush2.msra.mxu0 %v40
    %151 = vmatprep.subr.mxu0 0.0
    %152 = vmatpush2.msra.mxu0 %v39
    %153 = vmatprep.subr.mxu0 0.0
    %154 = vmatpush2.msra.mxu0 %v38
    %155 = vmatprep.mubr.f32.mxu0 %v85
    %156 = vmatmul.mubr.f32.gmra.mxu0 %v77
    %v157 = vpop.f32.mrf.mxu0
    %v158 = vadd.f32 %v67, %v157
    %v159 = vpop.f32.mrf.mxu0
    %160 = vdwg.mxu0
    %161 = vmatprep.subr.mxu0 0.0
    %162 = vmatpush1.msra.mxu0 0.0
    %163 = vmatprep.subr.mxu0 0.0
    %164 = vmatpush1.msra.mxu0 0.0
    %165 = vmatprep.subr.mxu0 0.0
    %166 = vmatpush1.msra.mxu0 0.0
    %167 = vmatprep.subr.mxu0 0.0
    %168 = vmatpush1.msra.mxu0 0.0
    %169 = vmatprep.subr.mxu0 0.0
    %170 = vmatpush1.msra.mxu0 0.0
    %171 = vmatprep.subr.mxu0 0.0
    %172 = vmatpush1.msra.mxu0 0.0
    %173 = vmatprep.subr.mxu0 0.0
    %174 = vmatpush1.msra.mxu0 0.0
    %175 = vmatprep.subr.mxu0 0.0
    %176 = vmatpush1.msra.mxu0 0.0
    %177 = vmatprep.subr.mxu0 0.0
    %178 = vmatpush1.msra.mxu0 %v61
    %179 = vmatprep.subr.mxu0 0.0
    %180 = vmatpush1.msra.mxu0 %v60
    %181 = vmatprep.subr.mxu0 0.0
    %182 = vmatpush1.msra.mxu0 %v59
    %183 = vmatprep.subr.mxu0 0.0
    %184 = vmatpush1.msra.mxu0 %v58
    %185 = vmatprep.subr.mxu0 0.0
    %186 = vmatpush1.msra.mxu0 %v57
    %187 = vmatprep.subr.mxu0 0.0
    %188 = vmatpush1.msra.mxu0 %v56
    %189 = vmatprep.subr.mxu0 0.0
    %190 = vmatpush1.msra.mxu0 %v55
    %191 = vmatprep.subr.mxu0 0.0
    %192 = vmatpush1.msra.mxu0 %v54
    %193 = vmatprep.subr.mxu0 0.0
    %194 = vmatpush2.msra.mxu0 0.0
    %195 = vmatprep.subr.mxu0 0.0
    %196 = vmatpush2.msra.mxu0 0.0
    %197 = vmatprep.subr.mxu0 0.0
    %198 = vmatpush2.msra.mxu0 0.0
    %199 = vmatprep.subr.mxu0 0.0
    %200 = vmatpush2.msra.mxu0 0.0
    %201 = vmatprep.subr.mxu0 0.0
    %202 = vmatpush2.msra.mxu0 0.0
    %203 = vmatprep.subr.mxu0 0.0
    %204 = vmatpush2.msra.mxu0 0.0
    %205 = vmatprep.subr.mxu0 0.0
    %206 = vmatpush2.msra.mxu0 0.0
    %207 = vmatprep.subr.mxu0 0.0
    %208 = vmatpush2.msra.mxu0 0.0
    %209 = vmatprep.subr.mxu0 0.0
    %210 = vmatpush2.msra.mxu0 0.0
    %211 = vmatprep.subr.mxu0 0.0
    %212 = vmatpush2.msra.mxu0 0.0
    %213 = vmatprep.subr.mxu0 0.0
    %214 = vmatpush2.msra.mxu0 0.0
    %215 = vmatprep.subr.mxu0 0.0
    %216 = vmatpush2.msra.mxu0 0.0
    %217 = vmatprep.subr.mxu0 0.0
    %218 = vmatpush2.msra.mxu0 0.0
    %219 = vmatprep.subr.mxu0 0.0
    %220 = vmatpush2.msra.mxu0 0.0
    %221 = vmatprep.subr.mxu0 0.0
    %222 = vmatpush2.msra.mxu0 0.0
    %223 = vmatprep.subr.mxu0 0.0
    %224 = vmatpush2.msra.mxu0 0.0
    %225 = vmatprep.mubr.f32.mxu0 0.0
    %226 = vmatmul.mubr.f32.gmra.mxu0 %v89
    %v227 = vpop.f32.mrf.mxu0
    %v228 = vadd.f32 %v158, %v227
    %v229 = vpop.f32.mrf.mxu0
    %230 = vdwg.mxu0
    %v231 = vmax.f32 %v228, 0.0
    %v232 = vld [vmem:[%s3] sm:$0xff]
    %v233 = vld [vmem:[%s3 + $0x8] sm:$0xff]
    %v234 = vld [vmem:[%s3 + $0x10] sm:$0xff]
    %v235 = vld [vmem:[%s3 + $0x18] sm:$0xff]
    %v236 = vld [vmem:[%s3 + $0x20] sm:$0xff]
    %v237 = vld [vmem:[%s3 + $0x28] sm:$0xff]
    %v238 = vld [vmem:[%s3 + $0x30] sm:$0xff]
    %v239 = vld [vmem:[%s3 + $0x38] sm:$0xff]
    %v240 = vld [vmem:[%s3 + $0x40] sm:$0xff]
    %v241 = vld [vmem:[%s3 + $0x48] sm:$0xff]
    %v242 = vld [vmem:[%s3 + $0x50] sm:$0xff]
    %v243 = vld [vmem:[%s3 + $0x58] sm:$0xff]
    %v244 = vld [vmem:[%s3 + $0x60] sm:$0xff]
    %v245 = vld [vmem:[%s3 + $0x68] sm:$0xff]
    %v246 = vld [vmem:[%s3 + $0x70] sm:$0xff]
    %v247 = vld [vmem:[%s3 + $0x78] sm:$0xff]
    %v248 = vld [vmem:[%s4] sm:$0x1]
    %v250 = vlaneseq
    %v251 = vshrl.u32 %v250, 7
    %v252 = vsub.s32 0, %v251
    %v253 = vrot.slane %v248, %v252
    %255 = vmatprep.subr.mxu0 0.0
    %256 = vmatpush1.msra.mxu0 %v247
    %257 = vmatprep.subr.mxu0 0.0
    %258 = vmatpush1.msra.mxu0 %v246
    %259 = vmatprep.subr.mxu0 0.0
    %260 = vmatpush1.msra.mxu0 %v245
    %261 = vmatprep.subr.mxu0 0.0
    %262 = vmatpush1.msra.mxu0 %v244
    %263 = vmatprep.subr.mxu0 0.0
    %264 = vmatpush1.msra.mxu0 %v243
    %265 = vmatprep.subr.mxu0 0.0
    %266 = vmatpush1.msra.mxu0 %v242
    %267 = vmatprep.subr.mxu0 0.0
    %268 = vmatpush1.msra.mxu0 %v241
    %269 = vmatprep.subr.mxu0 0.0
    %270 = vmatpush1.msra.mxu0 %v240
    %271 = vmatprep.subr.mxu0 0.0
    %272 = vmatpush1.msra.mxu0 %v239
    %273 = vmatprep.subr.mxu0 0.0
    %274 = vmatpush1.msra.mxu0 %v238
    %275 = vmatprep.subr.mxu0 0.0
    %276 = vmatpush1.msra.mxu0 %v237
    %277 = vmatprep.subr.mxu0 0.0
    %278 = vmatpush1.msra.mxu0 %v236
    %279 = vmatprep.subr.mxu0 0.0
    %280 = vmatpush1.msra.mxu0 %v235
    %281 = vmatprep.subr.mxu0 0.0
    %282 = vmatpush1.msra.mxu0 %v234
    %283 = vmatprep.subr.mxu0 0.0
    %284 = vmatpush1.msra.mxu0 %v233
    %285 = vmatprep.subr.mxu0 0.0
    %286 = vmatpush1.msra.mxu0 %v232
    %287 = vmatprep.subr.mxu0 0.0
    %288 = vmatpush2.msra.mxu0 0.0
    %289 = vmatprep.subr.mxu0 0.0
    %290 = vmatpush2.msra.mxu0 0.0
    %291 = vmatprep.subr.mxu0 0.0
    %292 = vmatpush2.msra.mxu0 0.0
    %293 = vmatprep.subr.mxu0 0.0
    %294 = vmatpush2.msra.mxu0 0.0
    %295 = vmatprep.subr.mxu0 0.0
    %296 = vmatpush2.msra.mxu0 0.0
    %297 = vmatprep.subr.mxu0 0.0
    %298 = vmatpush2.msra.mxu0 0.0
    %299 = vmatprep.subr.mxu0 0.0
    %300 = vmatpush2.msra.mxu0 0.0
    %301 = vmatprep.subr.mxu0 0.0
    %302 = vmatpush2.msra.mxu0 0.0
    %303 = vmatprep.subr.mxu0 0.0
    %304 = vmatpush2.msra.mxu0 0.0
    %305 = vmatprep.subr.mxu0 0.0
    %306 = vmatpush2.msra.mxu0 0.0
    %307 = vmatprep.subr.mxu0 0.0
    %308 = vmatpush2.msra.mxu0 0.0
    %309 = vmatprep.subr.mxu0 0.0
    %310 = vmatpush2.msra.mxu0 0.0
    %311 = vmatprep.subr.mxu0 0.0
    %312 = vmatpush2.msra.mxu0 0.0
    %313 = vmatprep.subr.mxu0 0.0
    %314 = vmatpush2.msra.mxu0 0.0
    %315 = vmatprep.subr.mxu0 0.0
    %316 = vmatpush2.msra.mxu0 0.0
    %317 = vmatprep.subr.mxu0 0.0
    %318 = vmatpush2.msra.mxu0 0.0
    %319 = vmatprep.mubr.f32.mxu0 0.0
    %320 = vmatmul.mubr.f32.gmra.mxu0 %v231
    %v321 = vpop.f32.mrf.mxu0
    %v322 = vadd.f32 %v253, %v321
    %v323 = vpop.f32.mrf.mxu0
    %324 = vdwg.mxu0
    %vm325 = vcmask 1041408
    %v326 = vsel %vm325, %v322, -inf
    %327 = vmax.xlane.f32.xlu0 %v326
    %v328 = vpop.xlane.xlu0 %327
    %v329 = vsub.f32 %v322, %v328
    %v330 = vmul.f32 %v329, 1.442695
    %v331 = vpow.pop %v330
    %v332 = vsel %vm325, %v331, 0.0
    %333 = vadd.xlane.f32.xlu0 %v332
    %v334 = vpop.xlane.xlu0 %333
    %v335 = vlog2.pop %v334
    %v336 = vmul.f32 %v335, 0.6931472
    %v337 = vadd.f32 %v336, %v328
    %v338 = vsub.f32 %v322, %v337
    %339 = vst [vmem:[#allocation2] sm:$0x3] %v338
    // Predicated region
    $region22: #{net_forward.5} parent=1 // pred_check
      _
    $region23: #{net_forward.5} parent=1 // pred_check_branch
      %341 = sbr.rel (0) target = $region25
    $region24: #{net_forward.5} parent=1 // pred_region
      %s343 = ssub.s32 32, 32
      %344 = vsyncadd [#allocation3], %s343
      %s346 = sshll.u32 [#allocation2], 4
      %s347 = int_to_ptr.vmem [resolvable:$true] %s346
      %349 = dma.vmem_to_hbm [thread:$0]  %s347, 32, %s5, [#allocation3]
    $region25: #{net_forward.5} parent=1 // pred_fallthru
      _
    // Predicated region
    $region26: #{net_forward.5} parent=1 // pred_check
      _
    $region27: #{net_forward.5} parent=1 // pred_check_branch
      %351 = sbr.rel (0) target = $region29
    $region28: #{net_forward.5} parent=1 // pred_region
      %352 = dma.done [#allocation3], 32
    $region29: #{net_forward.5} parent=1 // pred_fallthru
      _
    %353 = vsyncpa [#allocation3], 1

</llo_original>
